<compile_context>
chip_gen: v6e
topology: v6e:2x2x1
jax: 0.10.0
libtpu: 0.0.40
codegen_flags: <defaults>
</compile_context>

<pallas_src>
import functools

import jax
import jax.numpy as jnp
from jax.experimental import pallas as pl
from jax.experimental.pallas import tpu as pltpu

KSIZE = 7
PAD = 3  # kernel_size=7 -> padding=3


def _spatial_attention_kernel(H, W, w_ref, x_ref, o_ref):
    # w_ref : SMEM (2*7*7,) f32 -- flattened conv weight (in_ch, kh, kw)
    # x_ref : VMEM (Bt, C, H*W) -- lane-dense block of batch elements
    # o_ref : VMEM (Bt, H*W)    -- lane-dense sigmoid(conv) output
    Bt, C, HW = x_ref.shape

    x = x_ref[...]                                        # (Bt, C, HW)
    # Max is exact in the input dtype (bf16 stays bf16 on v6e/v7x VPUs);
    # the mean accumulates in f32.  sum * (1/C) keeps a divide off the VPU.
    max_out = jnp.max(x, axis=1).astype(jnp.float32)      # (Bt, HW)
    avg_out = jnp.sum(x.astype(jnp.float32), axis=1) * (1.0 / C)

    # 7x7 "same" conv (2 in-channels -> 1 out-channel, no bias) done directly
    # on the flat H*W axis.  Zero-pad PAD*W+PAD flat elements on each side so
    # every tap (kh, kw) is the static lane-offset slice [kh*W + kw :  + HW];
    # out-of-range rows land in the zero pad, out-of-range columns (row wrap)
    # are removed by the per-kw column masks below.
    zpad = jnp.zeros((Bt, PAD * W + PAD), jnp.float32)
    padded_maps = (jnp.concatenate([zpad, avg_out, zpad], axis=1),
                   jnp.concatenate([zpad, max_out, zpad], axis=1))

    colpos = jax.lax.broadcasted_iota(jnp.int32, (1, HW), 1) % W
    col_ok = [(colpos + (kw - PAD) >= 0) & (colpos + (kw - PAD) < W)
              for kw in range(KSIZE)]

    acc = jnp.zeros((Bt, HW), jnp.float32)
    for c in range(2):                                    # avg map, max map
        pm = padded_maps[c]
        for kw in range(KSIZE):
            part = jnp.zeros((Bt, HW), jnp.float32)
            for kh in range(KSIZE):
                s = kh * W + kw                           # static lane offset
                wv = w_ref[c * KSIZE * KSIZE + kh * KSIZE + kw]
                part = part + wv * pm[:, s:s + HW]
            # One column-validity select per (c, kw), hoisted out of the
            # kh accumulation.
            acc = acc + jnp.where(col_ok[kw], part, 0.0)

    o_ref[...] = jax.nn.sigmoid(acc).astype(o_ref.dtype)


def _block_vmem_bytes(bt, C, HW, x_itemsize, o_itemsize):
    """VMEM bytes for one grid step, including (8,128) tile padding and
    double buffering of the input and output blocks."""
    lanes = -(-HW // 128) * 128
    x_rows = -(-C // 8) * 8
    o_rows = -(-bt // 8) * 8
    x_bytes = bt * x_rows * lanes * x_itemsize
    o_bytes = o_rows * lanes * o_itemsize
    return 2 * (x_bytes + o_bytes)


def _pick_batch_block(B, C, HW, x_itemsize, o_itemsize, vmem_budget):
    """Choose a batch block size Bt.

    Constraints: Bt divides B; the (Bt, HW) output block needs Bt % 8 == 0 or
    Bt == B (second-to-last block dim rule); the padded, double-buffered
    working set fits the VMEM budget; and the x block's register footprint is
    bounded (the block is reduced in registers).  Among feasible sizes prefer
    one that keeps the grid >= 4 steps deep so double-buffering overlaps.
    """
    lane_groups = -(-HW // 128)
    sub_groups = -(-C // 8)
    per_batch_x_vregs = lane_groups * sub_groups          # f32 working set

    legal = [bt for bt in range(1, B + 1)
             if B % bt == 0 and (bt % 8 == 0 or bt == B)]
    fit = [bt for bt in legal
           if _block_vmem_bytes(bt, C, HW, x_itemsize, o_itemsize) <= vmem_budget
           and bt * per_batch_x_vregs <= 24]
    if not fit:
        # TODO(synk): fall back to channel / spatial tiling when even the
        # smallest legal batch block exceeds the budget.
        return min(legal)
    deep = [bt for bt in fit if B // bt >= 4]
    return max(deep) if deep else max(fit)


def spatial_attention(x, conv_weight):
    """x: (B, C, H, W); conv_weight: (1, 2, 7, 7) -> (B, 1, H, W)."""
    B, C, H, W = x.shape
    assert conv_weight.shape == (1, 2, KSIZE, KSIZE), conv_weight.shape
    HW = H * W

    w_flat = conv_weight.reshape(-1).astype(jnp.float32)   # (98,)
    x_flat = x.reshape(B, C, HW)                            # contiguous, free

    # Explicit VMEM budgeting (v7x: 64 MiB/core; v5e/v6e: 128 MiB), using the
    # tile-padded byte counts.
    try:
        vmem_cap = int(pltpu.get_tpu_info().vmem_capacity_bytes)
    except Exception:
        vmem_cap = 64 * 2 ** 20          # assume the smallest (v7x per-core)

    itemsize = x.dtype.itemsize
    Bt = _pick_batch_block(B, C, HW, itemsize, itemsize, vmem_cap // 3)
    need = _block_vmem_bytes(Bt, C, HW, itemsize, itemsize)
    vmem_limit = int(min(vmem_cap, max(need + (8 << 20), 32 << 20)))

    kernel = functools.partial(_spatial_attention_kernel, H, W)

    out_flat = pl.pallas_call(
        kernel,
        out_shape=jax.ShapeDtypeStruct((B, HW), x.dtype),
        grid=(B // Bt,),
        in_specs=[
            # 98 f32 weights, constant index: the ~0.4 KB SMEM copy is
            # negligible next to the x-block DMA.
            pl.BlockSpec(memory_space=pltpu.MemorySpace.SMEM),
            pl.BlockSpec((Bt, C, HW), lambda b: (b, 0, 0)),      # x (lane-dense)
        ],
        out_specs=pl.BlockSpec((Bt, HW), lambda b: (b, 0)),       # lane-dense out
        compiler_params=pltpu.CompilerParams(
            # No persistent scratch / one-time init any more, so the batch
            # axis can be split across v7x's two TensorCores.
            dimension_semantics=("parallel",),
            vmem_limit_bytes=vmem_limit,
        ),
    )(w_flat, x_flat)

    return out_flat.reshape(B, 1, H, W)


def spatial_attention_reference(x, conv_weight):
    """Pure-JAX reference matching the PyTorch module."""
    avg_out = jnp.mean(x, axis=1, keepdims=True)
    max_out = jnp.max(x, axis=1, keepdims=True)
    s = jnp.concatenate([avg_out, max_out], axis=1)          # (B, 2, H, W)
    y = jax.lax.conv_general_dilated(
        s, conv_weight,
        window_strides=(1, 1),
        padding=[(PAD, PAD), (PAD, PAD)],
        dimension_numbers=("NCHW", "OIHW", "NCHW"),
    )
    return jax.nn.sigmoid(y)


if __name__ == "__main__":
    key = jax.random.PRNGKey(0)
    kx, kw = jax.random.split(key)

    B, C, H, W = 2, 4, 16, 16
    x = jax.random.normal(kx, (B, C, H, W), dtype=jnp.float32)
    # Deterministic synthetic conv weight (shape follows nn.Conv2d(2, 1, 7)).
    conv_weight = 0.1 * jax.random.normal(kw, (1, 2, KSIZE, KSIZE),
                                          dtype=jnp.float32)

    out = jax.block_until_ready(spatial_attention(x, conv_weight))
    ref = jax.block_until_ready(spatial_attention_reference(x, conv_weight))

    assert out.shape == (B, 1, H, W), out.shape
    assert jnp.allclose(out, ref, atol=1e-5, rtol=1e-5), (
        float(jnp.max(jnp.abs(out - ref))))
    print("KERNEL_OK")
</pallas_src>

<mosaic_0001>
module attributes {stable_mosaic.version = 11 : i64} {
  func.func @_spatial_attention_kernel(%arg0: i32, %arg1: memref<98xf32, #tpu.memory_space<smem>>, %arg2: memref<2x4x256xf32, #tpu.memory_space<vmem>>, %arg3: memref<2x256xf32, #tpu.memory_space<vmem>>) attributes {dimension_semantics = [#tpu.dimension_semantics<parallel>], iteration_bounds = array<i64: 1>, scalar_prefetch = 0 : i64, scratch_operands = 0 : i64, tpu.core_type = #tpu.core_type<tc>, window_params = [{transform_indices = @transform_0, window_bounds = array<i64: 98>}, {transform_indices = @transform_1, window_bounds = array<i64: 2, 4, 256>}, {transform_indices = @transform_2, window_bounds = array<i64: 2, 256>}]} {
    %c0 = arith.constant 0 : index
    %c0_0 = arith.constant 0 : index
    %c0_1 = arith.constant 0 : index
    %0 = vector.load %arg2[%c0, %c0_0, %c0_1] : memref<2x4x256xf32, #tpu.memory_space<vmem>>, vector<2x4x256xf32>
    %cst = arith.constant dense<0xFF800000> : vector<2x256xf32>
    %1 = vector.multi_reduction <maximumf>, %0, %cst [1] : vector<2x4x256xf32> to vector<2x256xf32>
    %cst_2 = arith.constant dense<0.000000e+00> : vector<2x256xf32>
    %2 = vector.multi_reduction <add>, %0, %cst_2 [1] : vector<2x4x256xf32> to vector<2x256xf32>
    %cst_3 = arith.constant 2.500000e-01 : f32
    %3 = vector.broadcast %cst_3 : f32 to vector<2x256xf32>
    %4 = arith.mulf %2, %3 : vector<2x256xf32>
    %cst_4 = arith.constant 0.000000e+00 : f32
    %5 = vector.broadcast %cst_4 : f32 to vector<2x51xf32>
    %6 = tpu.concatenate %5, %4, %5 in 1 : vector<2x51xf32>, vector<2x256xf32>, vector<2x51xf32> -> vector<2x358xf32>
    %7 = tpu.concatenate %5, %1, %5 in 1 : vector<2x51xf32>, vector<2x256xf32>, vector<2x51xf32> -> vector<2x358xf32>
    %8 = tpu.iota {dimensions = array<i32: 1>} : vector<1x256xi32>
    %c16_i32 = arith.constant 16 : i32
    %c0_i32 = arith.constant 0 : i32
    %9 = arith.cmpi eq, %c16_i32, %c0_i32 : i32
    %c1_i32 = arith.constant 1 : i32
    %10 = arith.select %9, %c1_i32, %c16_i32 : i32
    %11 = vector.broadcast %10 : i32 to vector<1x256xi32>
    %12 = arith.remsi %8, %11 : vector<1x256xi32>
    %c0_i32_5 = arith.constant 0 : i32
    %13 = vector.broadcast %c0_i32_5 : i32 to vector<1x256xi32>
    %14 = arith.cmpi ne, %12, %13 : vector<1x256xi32>
    %c0_i32_6 = arith.constant 0 : i32
    %15 = vector.broadcast %c0_i32_6 : i32 to vector<1x256xi32>
    %16 = arith.cmpi slt, %12, %15 : vector<1x256xi32>
    %c0_i32_7 = arith.constant 0 : i32
    %17 = arith.cmpi slt, %10, %c0_i32_7 : i32
    %18 = vector.broadcast %17 : i1 to vector<1x256xi1>
    %19 = vector.broadcast %18 : vector<1x256xi1> to vector<1x256xi1>
    %20 = arith.xori %16, %19 : vector<1x256xi1>
    %21 = arith.andi %20, %14 : vector<1x256xi1>
    %22 = vector.broadcast %10 : i32 to vector<1x256xi32>
    %23 = arith.addi %12, %22 : vector<1x256xi32>
    %24 = arith.select %21, %23, %12 : vector<1x256xi1>, vector<1x256xi32>
    %c-3_i32 = arith.constant -3 : i32
    %25 = vector.broadcast %c-3_i32 : i32 to vector<1x256xi32>
    %26 = arith.addi %24, %25 : vector<1x256xi32>
    %c0_i32_8 = arith.constant 0 : i32
    %27 = vector.broadcast %c0_i32_8 : i32 to vector<1x256xi32>
    %28 = arith.cmpi sge, %26, %27 : vector<1x256xi32>
    %c-3_i32_9 = arith.constant -3 : i32
    %29 = vector.broadcast %c-3_i32_9 : i32 to vector<1x256xi32>
    %30 = arith.addi %24, %29 : vector<1x256xi32>
    %c16_i32_10 = arith.constant 16 : i32
    %31 = vector.broadcast %c16_i32_10 : i32 to vector<1x256xi32>
    %32 = arith.cmpi slt, %30, %31 : vector<1x256xi32>
    %33 = arith.andi %28, %32 : vector<1x256xi1>
    %c-2_i32 = arith.constant -2 : i32
    %34 = vector.broadcast %c-2_i32 : i32 to vector<1x256xi32>
    %35 = arith.addi %24, %34 : vector<1x256xi32>
    %c0_i32_11 = arith.constant 0 : i32
    %36 = vector.broadcast %c0_i32_11 : i32 to vector<1x256xi32>
    %37 = arith.cmpi sge, %35, %36 : vector<1x256xi32>
    %c-2_i32_12 = arith.constant -2 : i32
    %38 = vector.broadcast %c-2_i32_12 : i32 to vector<1x256xi32>
    %39 = arith.addi %24, %38 : vector<1x256xi32>
    %c16_i32_13 = arith.constant 16 : i32
    %40 = vector.broadcast %c16_i32_13 : i32 to vector<1x256xi32>
    %41 = arith.cmpi slt, %39, %40 : vector<1x256xi32>
    %42 = arith.andi %37, %41 : vector<1x256xi1>
    %c-1_i32 = arith.constant -1 : i32
    %43 = vector.broadcast %c-1_i32 : i32 to vector<1x256xi32>
    %44 = arith.addi %24, %43 : vector<1x256xi32>
    %c0_i32_14 = arith.constant 0 : i32
    %45 = vector.broadcast %c0_i32_14 : i32 to vector<1x256xi32>
    %46 = arith.cmpi sge, %44, %45 : vector<1x256xi32>
    %c-1_i32_15 = arith.constant -1 : i32
    %47 = vector.broadcast %c-1_i32_15 : i32 to vector<1x256xi32>
    %48 = arith.addi %24, %47 : vector<1x256xi32>
    %c16_i32_16 = arith.constant 16 : i32
    %49 = vector.broadcast %c16_i32_16 : i32 to vector<1x256xi32>
    %50 = arith.cmpi slt, %48, %49 : vector<1x256xi32>
    %51 = arith.andi %46, %50 : vector<1x256xi1>
    %c0_i32_17 = arith.constant 0 : i32
    %52 = vector.broadcast %c0_i32_17 : i32 to vector<1x256xi32>
    %53 = arith.addi %24, %52 : vector<1x256xi32>
    %c0_i32_18 = arith.constant 0 : i32
    %54 = vector.broadcast %c0_i32_18 : i32 to vector<1x256xi32>
    %55 = arith.cmpi sge, %53, %54 : vector<1x256xi32>
    %c0_i32_19 = arith.constant 0 : i32
    %56 = vector.broadcast %c0_i32_19 : i32 to vector<1x256xi32>
    %57 = arith.addi %24, %56 : vector<1x256xi32>
    %c16_i32_20 = arith.constant 16 : i32
    %58 = vector.broadcast %c16_i32_20 : i32 to vector<1x256xi32>
    %59 = arith.cmpi slt, %57, %58 : vector<1x256xi32>
    %60 = arith.andi %55, %59 : vector<1x256xi1>
    %c1_i32_21 = arith.constant 1 : i32
    %61 = vector.broadcast %c1_i32_21 : i32 to vector<1x256xi32>
    %62 = arith.addi %24, %61 : vector<1x256xi32>
    %c0_i32_22 = arith.constant 0 : i32
    %63 = vector.broadcast %c0_i32_22 : i32 to vector<1x256xi32>
    %64 = arith.cmpi sge, %62, %63 : vector<1x256xi32>
    %c1_i32_23 = arith.constant 1 : i32
    %65 = vector.broadcast %c1_i32_23 : i32 to vector<1x256xi32>
    %66 = arith.addi %24, %65 : vector<1x256xi32>
    %c16_i32_24 = arith.constant 16 : i32
    %67 = vector.broadcast %c16_i32_24 : i32 to vector<1x256xi32>
    %68 = arith.cmpi slt, %66, %67 : vector<1x256xi32>
    %69 = arith.andi %64, %68 : vector<1x256xi1>
    %c2_i32 = arith.constant 2 : i32
    %70 = vector.broadcast %c2_i32 : i32 to vector<1x256xi32>
    %71 = arith.addi %24, %70 : vector<1x256xi32>
    %c0_i32_25 = arith.constant 0 : i32
    %72 = vector.broadcast %c0_i32_25 : i32 to vector<1x256xi32>
    %73 = arith.cmpi sge, %71, %72 : vector<1x256xi32>
    %c2_i32_26 = arith.constant 2 : i32
    %74 = vector.broadcast %c2_i32_26 : i32 to vector<1x256xi32>
    %75 = arith.addi %24, %74 : vector<1x256xi32>
    %c16_i32_27 = arith.constant 16 : i32
    %76 = vector.broadcast %c16_i32_27 : i32 to vector<1x256xi32>
    %77 = arith.cmpi slt, %75, %76 : vector<1x256xi32>
    %78 = arith.andi %73, %77 : vector<1x256xi1>
    %c3_i32 = arith.constant 3 : i32
    %79 = vector.broadcast %c3_i32 : i32 to vector<1x256xi32>
    %80 = arith.addi %24, %79 : vector<1x256xi32>
    %c0_i32_28 = arith.constant 0 : i32
    %81 = vector.broadcast %c0_i32_28 : i32 to vector<1x256xi32>
    %82 = arith.cmpi sge, %80, %81 : vector<1x256xi32>
    %c3_i32_29 = arith.constant 3 : i32
    %83 = vector.broadcast %c3_i32_29 : i32 to vector<1x256xi32>
    %84 = arith.addi %24, %83 : vector<1x256xi32>
    %c16_i32_30 = arith.constant 16 : i32
    %85 = vector.broadcast %c16_i32_30 : i32 to vector<1x256xi32>
    %86 = arith.cmpi slt, %84, %85 : vector<1x256xi32>
    %87 = arith.andi %82, %86 : vector<1x256xi1>
    %cst_31 = arith.constant 0.000000e+00 : f32
    %88 = vector.broadcast %cst_31 : f32 to vector<2x256xf32>
    %cst_32 = arith.constant 0.000000e+00 : f32
    %89 = vector.broadcast %cst_32 : f32 to vector<2x256xf32>
    %c0_33 = arith.constant 0 : index
    %90 = memref.load %arg1[%c0_33] : memref<98xf32, #tpu.memory_space<smem>>
    %91 = vector.extract_strided_slice %6 {offsets = [0, 0], sizes = [2, 256], strides = [1, 1]} : vector<2x358xf32> to vector<2x256xf32>
    %92 = vector.broadcast %90 : f32 to vector<2x256xf32>
    %93 = arith.mulf %92, %91 : vector<2x256xf32>
    %94 = arith.addf %89, %93 : vector<2x256xf32>
    %c7 = arith.constant 7 : index
    %95 = memref.load %arg1[%c7] : memref<98xf32, #tpu.memory_space<smem>>
    %96 = vector.extract_strided_slice %6 {offsets = [0, 16], sizes = [2, 256], strides = [1, 1]} : vector<2x358xf32> to vector<2x256xf32>
    %97 = vector.broadcast %95 : f32 to vector<2x256xf32>
    %98 = arith.mulf %97, %96 : vector<2x256xf32>
    %99 = arith.addf %94, %98 : vector<2x256xf32>
    %c14 = arith.constant 14 : index
    %100 = memref.load %arg1[%c14] : memref<98xf32, #tpu.memory_space<smem>>
    %101 = vector.extract_strided_slice %6 {offsets = [0, 32], sizes = [2, 256], strides = [1, 1]} : vector<2x358xf32> to vector<2x256xf32>
    %102 = vector.broadcast %100 : f32 to vector<2x256xf32>
    %103 = arith.mulf %102, %101 : vector<2x256xf32>
    %104 = arith.addf %99, %103 : vector<2x256xf32>
    %c21 = arith.constant 21 : index
    %105 = memref.load %arg1[%c21] : memref<98xf32, #tpu.memory_space<smem>>
    %106 = vector.extract_strided_slice %6 {offsets = [0, 48], sizes = [2, 256], strides = [1, 1]} : vector<2x358xf32> to vector<2x256xf32>
    %107 = vector.broadcast %105 : f32 to vector<2x256xf32>
    %108 = arith.mulf %107, %106 : vector<2x256xf32>
    %109 = arith.addf %104, %108 : vector<2x256xf32>
    %c28 = arith.constant 28 : index
    %110 = memref.load %arg1[%c28] : memref<98xf32, #tpu.memory_space<smem>>
    %111 = vector.extract_strided_slice %6 {offsets = [0, 64], sizes = [2, 256], strides = [1, 1]} : vector<2x358xf32> to vector<2x256xf32>
    %112 = vector.broadcast %110 : f32 to vector<2x256xf32>
    %113 = arith.mulf %112, %111 : vector<2x256xf32>
    %114 = arith.addf %109, %113 : vector<2x256xf32>
    %c35 = arith.constant 35 : index
    %115 = memref.load %arg1[%c35] : memref<98xf32, #tpu.memory_space<smem>>
    %116 = vector.extract_strided_slice %6 {offsets = [0, 80], sizes = [2, 256], strides = [1, 1]} : vector<2x358xf32> to vector<2x256xf32>
    %117 = vector.broadcast %115 : f32 to vector<2x256xf32>
    %118 = arith.mulf %117, %116 : vector<2x256xf32>
    %119 = arith.addf %114, %118 : vector<2x256xf32>
    %c42 = arith.constant 42 : index
    %120 = memref.load %arg1[%c42] : memref<98xf32, #tpu.memory_space<smem>>
    %121 = vector.extract_strided_slice %6 {offsets = [0, 96], sizes = [2, 256], strides = [1, 1]} : vector<2x358xf32> to vector<2x256xf32>
    %122 = vector.broadcast %120 : f32 to vector<2x256xf32>
    %123 = arith.mulf %122, %121 : vector<2x256xf32>
    %124 = arith.addf %119, %123 : vector<2x256xf32>
    %cst_34 = arith.constant 0.000000e+00 : f32
    %125 = vector.shape_cast %33 : vector<1x256xi1> to vector<1x256xi1>
    %126 = vector.broadcast %125 : vector<1x256xi1> to vector<2x256xi1>
    %127 = vector.broadcast %cst_34 : f32 to vector<2x256xf32>
    %128 = arith.select %126, %124, %127 : vector<2x256xi1>, vector<2x256xf32>
    %129 = arith.addf %88, %128 : vector<2x256xf32>
    %cst_35 = arith.constant 0.000000e+00 : f32
    %130 = vector.broadcast %cst_35 : f32 to vector<2x256xf32>
    %c1 = arith.constant 1 : index
    %131 = memref.load %arg1[%c1] : memref<98xf32, #tpu.memory_space<smem>>
    %132 = vector.extract_strided_slice %6 {offsets = [0, 1], sizes = [2, 256], strides = [1, 1]} : vector<2x358xf32> to vector<2x256xf32>
    %133 = vector.broadcast %131 : f32 to vector<2x256xf32>
    %134 = arith.mulf %133, %132 : vector<2x256xf32>
    %135 = arith.addf %130, %134 : vector<2x256xf32>
    %c8 = arith.constant 8 : index
    %136 = memref.load %arg1[%c8] : memref<98xf32, #tpu.memory_space<smem>>
    %137 = vector.extract_strided_slice %6 {offsets = [0, 17], sizes = [2, 256], strides = [1, 1]} : vector<2x358xf32> to vector<2x256xf32>
    %138 = vector.broadcast %136 : f32 to vector<2x256xf32>
    %139 = arith.mulf %138, %137 : vector<2x256xf32>
    %140 = arith.addf %135, %139 : vector<2x256xf32>
    %c15 = arith.constant 15 : index
    %141 = memref.load %arg1[%c15] : memref<98xf32, #tpu.memory_space<smem>>
    %142 = vector.extract_strided_slice %6 {offsets = [0, 33], sizes = [2, 256], strides = [1, 1]} : vector<2x358xf32> to vector<2x256xf32>
    %143 = vector.broadcast %141 : f32 to vector<2x256xf32>
    %144 = arith.mulf %143, %142 : vector<2x256xf32>
    %145 = arith.addf %140, %144 : vector<2x256xf32>
    %c22 = arith.constant 22 : index
    %146 = memref.load %arg1[%c22] : memref<98xf32, #tpu.memory_space<smem>>
    %147 = vector.extract_strided_slice %6 {offsets = [0, 49], sizes = [2, 256], strides = [1, 1]} : vector<2x358xf32> to vector<2x256xf32>
    %148 = vector.broadcast %146 : f32 to vector<2x256xf32>
    %149 = arith.mulf %148, %147 : vector<2x256xf32>
    %150 = arith.addf %145, %149 : vector<2x256xf32>
    %c29 = arith.constant 29 : index
    %151 = memref.load %arg1[%c29] : memref<98xf32, #tpu.memory_space<smem>>
    %152 = vector.extract_strided_slice %6 {offsets = [0, 65], sizes = [2, 256], strides = [1, 1]} : vector<2x358xf32> to vector<2x256xf32>
    %153 = vector.broadcast %151 : f32 to vector<2x256xf32>
    %154 = arith.mulf %153, %152 : vector<2x256xf32>
    %155 = arith.addf %150, %154 : vector<2x256xf32>
    %c36 = arith.constant 36 : index
    %156 = memref.load %arg1[%c36] : memref<98xf32, #tpu.memory_space<smem>>
    %157 = vector.extract_strided_slice %6 {offsets = [0, 81], sizes = [2, 256], strides = [1, 1]} : vector<2x358xf32> to vector<2x256xf32>
    %158 = vector.broadcast %156 : f32 to vector<2x256xf32>
    %159 = arith.mulf %158, %157 : vector<2x256xf32>
    %160 = arith.addf %155, %159 : vector<2x256xf32>
    %c43 = arith.constant 43 : index
    %161 = memref.load %arg1[%c43] : memref<98xf32, #tpu.memory_space<smem>>
    %162 = vector.extract_strided_slice %6 {offsets = [0, 97], sizes = [2, 256], strides = [1, 1]} : vector<2x358xf32> to vector<2x256xf32>
    %163 = vector.broadcast %161 : f32 to vector<2x256xf32>
    %164 = arith.mulf %163, %162 : vector<2x256xf32>
    %165 = arith.addf %160, %164 : vector<2x256xf32>
    %cst_36 = arith.constant 0.000000e+00 : f32
    %166 = vector.shape_cast %42 : vector<1x256xi1> to vector<1x256xi1>
    %167 = vector.broadcast %166 : vector<1x256xi1> to vector<2x256xi1>
    %168 = vector.broadcast %cst_36 : f32 to vector<2x256xf32>
    %169 = arith.select %167, %165, %168 : vector<2x256xi1>, vector<2x256xf32>
    %170 = arith.addf %129, %169 : vector<2x256xf32>
    %cst_37 = arith.constant 0.000000e+00 : f32
    %171 = vector.broadcast %cst_37 : f32 to vector<2x256xf32>
    %c2 = arith.constant 2 : index
    %172 = memref.load %arg1[%c2] : memref<98xf32, #tpu.memory_space<smem>>
    %173 = vector.extract_strided_slice %6 {offsets = [0, 2], sizes = [2, 256], strides = [1, 1]} : vector<2x358xf32> to vector<2x256xf32>
    %174 = vector.broadcast %172 : f32 to vector<2x256xf32>
    %175 = arith.mulf %174, %173 : vector<2x256xf32>
    %176 = arith.addf %171, %175 : vector<2x256xf32>
    %c9 = arith.constant 9 : index
    %177 = memref.load %arg1[%c9] : memref<98xf32, #tpu.memory_space<smem>>
    %178 = vector.extract_strided_slice %6 {offsets = [0, 18], sizes = [2, 256], strides = [1, 1]} : vector<2x358xf32> to vector<2x256xf32>
    %179 = vector.broadcast %177 : f32 to vector<2x256xf32>
    %180 = arith.mulf %179, %178 : vector<2x256xf32>
    %181 = arith.addf %176, %180 : vector<2x256xf32>
    %c16 = arith.constant 16 : index
    %182 = memref.load %arg1[%c16] : memref<98xf32, #tpu.memory_space<smem>>
    %183 = vector.extract_strided_slice %6 {offsets = [0, 34], sizes = [2, 256], strides = [1, 1]} : vector<2x358xf32> to vector<2x256xf32>
    %184 = vector.broadcast %182 : f32 to vector<2x256xf32>
    %185 = arith.mulf %184, %183 : vector<2x256xf32>
    %186 = arith.addf %181, %185 : vector<2x256xf32>
    %c23 = arith.constant 23 : index
    %187 = memref.load %arg1[%c23] : memref<98xf32, #tpu.memory_space<smem>>
    %188 = vector.extract_strided_slice %6 {offsets = [0, 50], sizes = [2, 256], strides = [1, 1]} : vector<2x358xf32> to vector<2x256xf32>
    %189 = vector.broadcast %187 : f32 to vector<2x256xf32>
    %190 = arith.mulf %189, %188 : vector<2x256xf32>
    %191 = arith.addf %186, %190 : vector<2x256xf32>
    %c30 = arith.constant 30 : index
    %192 = memref.load %arg1[%c30] : memref<98xf32, #tpu.memory_space<smem>>
    %193 = vector.extract_strided_slice %6 {offsets = [0, 66], sizes = [2, 256], strides = [1, 1]} : vector<2x358xf32> to vector<2x256xf32>
    %194 = vector.broadcast %192 : f32 to vector<2x256xf32>
    %195 = arith.mulf %194, %193 : vector<2x256xf32>
    %196 = arith.addf %191, %195 : vector<2x256xf32>
    %c37 = arith.constant 37 : index
    %197 = memref.load %arg1[%c37] : memref<98xf32, #tpu.memory_space<smem>>
    %198 = vector.extract_strided_slice %6 {offsets = [0, 82], sizes = [2, 256], strides = [1, 1]} : vector<2x358xf32> to vector<2x256xf32>
    %199 = vector.broadcast %197 : f32 to vector<2x256xf32>
    %200 = arith.mulf %199, %198 : vector<2x256xf32>
    %201 = arith.addf %196, %200 : vector<2x256xf32>
    %c44 = arith.constant 44 : index
    %202 = memref.load %arg1[%c44] : memref<98xf32, #tpu.memory_space<smem>>
    %203 = vector.extract_strided_slice %6 {offsets = [0, 98], sizes = [2, 256], strides = [1, 1]} : vector<2x358xf32> to vector<2x256xf32>
    %204 = vector.broadcast %202 : f32 to vector<2x256xf32>
    %205 = arith.mulf %204, %203 : vector<2x256xf32>
    %206 = arith.addf %201, %205 : vector<2x256xf32>
    %cst_38 = arith.constant 0.000000e+00 : f32
    %207 = vector.shape_cast %51 : vector<1x256xi1> to vector<1x256xi1>
    %208 = vector.broadcast %207 : vector<1x256xi1> to vector<2x256xi1>
    %209 = vector.broadcast %cst_38 : f32 to vector<2x256xf32>
    %210 = arith.select %208, %206, %209 : vector<2x256xi1>, vector<2x256xf32>
    %211 = arith.addf %170, %210 : vector<2x256xf32>
    %cst_39 = arith.constant 0.000000e+00 : f32
    %212 = vector.broadcast %cst_39 : f32 to vector<2x256xf32>
    %c3 = arith.constant 3 : index
    %213 = memref.load %arg1[%c3] : memref<98xf32, #tpu.memory_space<smem>>
    %214 = vector.extract_strided_slice %6 {offsets = [0, 3], sizes = [2, 256], strides = [1, 1]} : vector<2x358xf32> to vector<2x256xf32>
    %215 = vector.broadcast %213 : f32 to vector<2x256xf32>
    %216 = arith.mulf %215, %214 : vector<2x256xf32>
    %217 = arith.addf %212, %216 : vector<2x256xf32>
    %c10 = arith.constant 10 : index
    %218 = memref.load %arg1[%c10] : memref<98xf32, #tpu.memory_space<smem>>
    %219 = vector.extract_strided_slice %6 {offsets = [0, 19], sizes = [2, 256], strides = [1, 1]} : vector<2x358xf32> to vector<2x256xf32>
    %220 = vector.broadcast %218 : f32 to vector<2x256xf32>
    %221 = arith.mulf %220, %219 : vector<2x256xf32>
    %222 = arith.addf %217, %221 : vector<2x256xf32>
    %c17 = arith.constant 17 : index
    %223 = memref.load %arg1[%c17] : memref<98xf32, #tpu.memory_space<smem>>
    %224 = vector.extract_strided_slice %6 {offsets = [0, 35], sizes = [2, 256], strides = [1, 1]} : vector<2x358xf32> to vector<2x256xf32>
    %225 = vector.broadcast %223 : f32 to vector<2x256xf32>
    %226 = arith.mulf %225, %224 : vector<2x256xf32>
    %227 = arith.addf %222, %226 : vector<2x256xf32>
    %c24 = arith.constant 24 : index
    %228 = memref.load %arg1[%c24] : memref<98xf32, #tpu.memory_space<smem>>
    %229 = vector.extract_strided_slice %6 {offsets = [0, 51], sizes = [2, 256], strides = [1, 1]} : vector<2x358xf32> to vector<2x256xf32>
    %230 = vector.broadcast %228 : f32 to vector<2x256xf32>
    %231 = arith.mulf %230, %229 : vector<2x256xf32>
    %232 = arith.addf %227, %231 : vector<2x256xf32>
    %c31 = arith.constant 31 : index
    %233 = memref.load %arg1[%c31] : memref<98xf32, #tpu.memory_space<smem>>
    %234 = vector.extract_strided_slice %6 {offsets = [0, 67], sizes = [2, 256], strides = [1, 1]} : vector<2x358xf32> to vector<2x256xf32>
    %235 = vector.broadcast %233 : f32 to vector<2x256xf32>
    %236 = arith.mulf %235, %234 : vector<2x256xf32>
    %237 = arith.addf %232, %236 : vector<2x256xf32>
    %c38 = arith.constant 38 : index
    %238 = memref.load %arg1[%c38] : memref<98xf32, #tpu.memory_space<smem>>
    %239 = vector.extract_strided_slice %6 {offsets = [0, 83], sizes = [2, 256], strides = [1, 1]} : vector<2x358xf32> to vector<2x256xf32>
    %240 = vector.broadcast %238 : f32 to vector<2x256xf32>
    %241 = arith.mulf %240, %239 : vector<2x256xf32>
    %242 = arith.addf %237, %241 : vector<2x256xf32>
    %c45 = arith.constant 45 : index
    %243 = memref.load %arg1[%c45] : memref<98xf32, #tpu.memory_space<smem>>
    %244 = vector.extract_strided_slice %6 {offsets = [0, 99], sizes = [2, 256], strides = [1, 1]} : vector<2x358xf32> to vector<2x256xf32>
    %245 = vector.broadcast %243 : f32 to vector<2x256xf32>
    %246 = arith.mulf %245, %244 : vector<2x256xf32>
    %247 = arith.addf %242, %246 : vector<2x256xf32>
    %cst_40 = arith.constant 0.000000e+00 : f32
    %248 = vector.shape_cast %60 : vector<1x256xi1> to vector<1x256xi1>
    %249 = vector.broadcast %248 : vector<1x256xi1> to vector<2x256xi1>
    %250 = vector.broadcast %cst_40 : f32 to vector<2x256xf32>
    %251 = arith.select %249, %247, %250 : vector<2x256xi1>, vector<2x256xf32>
    %252 = arith.addf %211, %251 : vector<2x256xf32>
    %cst_41 = arith.constant 0.000000e+00 : f32
    %253 = vector.broadcast %cst_41 : f32 to vector<2x256xf32>
    %c4 = arith.constant 4 : index
    %254 = memref.load %arg1[%c4] : memref<98xf32, #tpu.memory_space<smem>>
    %255 = vector.extract_strided_slice %6 {offsets = [0, 4], sizes = [2, 256], strides = [1, 1]} : vector<2x358xf32> to vector<2x256xf32>
    %256 = vector.broadcast %254 : f32 to vector<2x256xf32>
    %257 = arith.mulf %256, %255 : vector<2x256xf32>
    %258 = arith.addf %253, %257 : vector<2x256xf32>
    %c11 = arith.constant 11 : index
    %259 = memref.load %arg1[%c11] : memref<98xf32, #tpu.memory_space<smem>>
    %260 = vector.extract_strided_slice %6 {offsets = [0, 20], sizes = [2, 256], strides = [1, 1]} : vector<2x358xf32> to vector<2x256xf32>
    %261 = vector.broadcast %259 : f32 to vector<2x256xf32>
    %262 = arith.mulf %261, %260 : vector<2x256xf32>
    %263 = arith.addf %258, %262 : vector<2x256xf32>
    %c18 = arith.constant 18 : index
    %264 = memref.load %arg1[%c18] : memref<98xf32, #tpu.memory_space<smem>>
    %265 = vector.extract_strided_slice %6 {offsets = [0, 36], sizes = [2, 256], strides = [1, 1]} : vector<2x358xf32> to vector<2x256xf32>
    %266 = vector.broadcast %264 : f32 to vector<2x256xf32>
    %267 = arith.mulf %266, %265 : vector<2x256xf32>
    %268 = arith.addf %263, %267 : vector<2x256xf32>
    %c25 = arith.constant 25 : index
    %269 = memref.load %arg1[%c25] : memref<98xf32, #tpu.memory_space<smem>>
    %270 = vector.extract_strided_slice %6 {offsets = [0, 52], sizes = [2, 256], strides = [1, 1]} : vector<2x358xf32> to vector<2x256xf32>
    %271 = vector.broadcast %269 : f32 to vector<2x256xf32>
    %272 = arith.mulf %271, %270 : vector<2x256xf32>
    %273 = arith.addf %268, %272 : vector<2x256xf32>
    %c32 = arith.constant 32 : index
    %274 = memref.load %arg1[%c32] : memref<98xf32, #tpu.memory_space<smem>>
    %275 = vector.extract_strided_slice %6 {offsets = [0, 68], sizes = [2, 256], strides = [1, 1]} : vector<2x358xf32> to vector<2x256xf32>
    %276 = vector.broadcast %274 : f32 to vector<2x256xf32>
    %277 = arith.mulf %276, %275 : vector<2x256xf32>
    %278 = arith.addf %273, %277 : vector<2x256xf32>
    %c39 = arith.constant 39 : index
    %279 = memref.load %arg1[%c39] : memref<98xf32, #tpu.memory_space<smem>>
    %280 = vector.extract_strided_slice %6 {offsets = [0, 84], sizes = [2, 256], strides = [1, 1]} : vector<2x358xf32> to vector<2x256xf32>
    %281 = vector.broadcast %279 : f32 to vector<2x256xf32>
    %282 = arith.mulf %281, %280 : vector<2x256xf32>
    %283 = arith.addf %278, %282 : vector<2x256xf32>
    %c46 = arith.constant 46 : index
    %284 = memref.load %arg1[%c46] : memref<98xf32, #tpu.memory_space<smem>>
    %285 = vector.extract_strided_slice %6 {offsets = [0, 100], sizes = [2, 256], strides = [1, 1]} : vector<2x358xf32> to vector<2x256xf32>
    %286 = vector.broadcast %284 : f32 to vector<2x256xf32>
    %287 = arith.mulf %286, %285 : vector<2x256xf32>
    %288 = arith.addf %283, %287 : vector<2x256xf32>
    %cst_42 = arith.constant 0.000000e+00 : f32
    %289 = vector.shape_cast %69 : vector<1x256xi1> to vector<1x256xi1>
    %290 = vector.broadcast %289 : vector<1x256xi1> to vector<2x256xi1>
    %291 = vector.broadcast %cst_42 : f32 to vector<2x256xf32>
    %292 = arith.select %290, %288, %291 : vector<2x256xi1>, vector<2x256xf32>
    %293 = arith.addf %252, %292 : vector<2x256xf32>
    %cst_43 = arith.constant 0.000000e+00 : f32
    %294 = vector.broadcast %cst_43 : f32 to vector<2x256xf32>
    %c5 = arith.constant 5 : index
    %295 = memref.load %arg1[%c5] : memref<98xf32, #tpu.memory_space<smem>>
    %296 = vector.extract_strided_slice %6 {offsets = [0, 5], sizes = [2, 256], strides = [1, 1]} : vector<2x358xf32> to vector<2x256xf32>
    %297 = vector.broadcast %295 : f32 to vector<2x256xf32>
    %298 = arith.mulf %297, %296 : vector<2x256xf32>
    %299 = arith.addf %294, %298 : vector<2x256xf32>
    %c12 = arith.constant 12 : index
    %300 = memref.load %arg1[%c12] : memref<98xf32, #tpu.memory_space<smem>>
    %301 = vector.extract_strided_slice %6 {offsets = [0, 21], sizes = [2, 256], strides = [1, 1]} : vector<2x358xf32> to vector<2x256xf32>
    %302 = vector.broadcast %300 : f32 to vector<2x256xf32>
    %303 = arith.mulf %302, %301 : vector<2x256xf32>
    %304 = arith.addf %299, %303 : vector<2x256xf32>
    %c19 = arith.constant 19 : index
    %305 = memref.load %arg1[%c19] : memref<98xf32, #tpu.memory_space<smem>>
    %306 = vector.extract_strided_slice %6 {offsets = [0, 37], sizes = [2, 256], strides = [1, 1]} : vector<2x358xf32> to vector<2x256xf32>
    %307 = vector.broadcast %305 : f32 to vector<2x256xf32>
    %308 = arith.mulf %307, %306 : vector<2x256xf32>
    %309 = arith.addf %304, %308 : vector<2x256xf32>
    %c26 = arith.constant 26 : index
    %310 = memref.load %arg1[%c26] : memref<98xf32, #tpu.memory_space<smem>>
    %311 = vector.extract_strided_slice %6 {offsets = [0, 53], sizes = [2, 256], strides = [1, 1]} : vector<2x358xf32> to vector<2x256xf32>
    %312 = vector.broadcast %310 : f32 to vector<2x256xf32>
    %313 = arith.mulf %312, %311 : vector<2x256xf32>
    %314 = arith.addf %309, %313 : vector<2x256xf32>
    %c33 = arith.constant 33 : index
    %315 = memref.load %arg1[%c33] : memref<98xf32, #tpu.memory_space<smem>>
    %316 = vector.extract_strided_slice %6 {offsets = [0, 69], sizes = [2, 256], strides = [1, 1]} : vector<2x358xf32> to vector<2x256xf32>
    %317 = vector.broadcast %315 : f32 to vector<2x256xf32>
    %318 = arith.mulf %317, %316 : vector<2x256xf32>
    %319 = arith.addf %314, %318 : vector<2x256xf32>
    %c40 = arith.constant 40 : index
    %320 = memref.load %arg1[%c40] : memref<98xf32, #tpu.memory_space<smem>>
    %321 = vector.extract_strided_slice %6 {offsets = [0, 85], sizes = [2, 256], strides = [1, 1]} : vector<2x358xf32> to vector<2x256xf32>
    %322 = vector.broadcast %320 : f32 to vector<2x256xf32>
    %323 = arith.mulf %322, %321 : vector<2x256xf32>
    %324 = arith.addf %319, %323 : vector<2x256xf32>
    %c47 = arith.constant 47 : index
    %325 = memref.load %arg1[%c47] : memref<98xf32, #tpu.memory_space<smem>>
    %326 = vector.extract_strided_slice %6 {offsets = [0, 101], sizes = [2, 256], strides = [1, 1]} : vector<2x358xf32> to vector<2x256xf32>
    %327 = vector.broadcast %325 : f32 to vector<2x256xf32>
    %328 = arith.mulf %327, %326 : vector<2x256xf32>
    %329 = arith.addf %324, %328 : vector<2x256xf32>
    %cst_44 = arith.constant 0.000000e+00 : f32
    %330 = vector.shape_cast %78 : vector<1x256xi1> to vector<1x256xi1>
    %331 = vector.broadcast %330 : vector<1x256xi1> to vector<2x256xi1>
    %332 = vector.broadcast %cst_44 : f32 to vector<2x256xf32>
    %333 = arith.select %331, %329, %332 : vector<2x256xi1>, vector<2x256xf32>
    %334 = arith.addf %293, %333 : vector<2x256xf32>
    %cst_45 = arith.constant 0.000000e+00 : f32
    %335 = vector.broadcast %cst_45 : f32 to vector<2x256xf32>
    %c6 = arith.constant 6 : index
    %336 = memref.load %arg1[%c6] : memref<98xf32, #tpu.memory_space<smem>>
    %337 = vector.extract_strided_slice %6 {offsets = [0, 6], sizes = [2, 256], strides = [1, 1]} : vector<2x358xf32> to vector<2x256xf32>
    %338 = vector.broadcast %336 : f32 to vector<2x256xf32>
    %339 = arith.mulf %338, %337 : vector<2x256xf32>
    %340 = arith.addf %335, %339 : vector<2x256xf32>
    %c13 = arith.constant 13 : index
    %341 = memref.load %arg1[%c13] : memref<98xf32, #tpu.memory_space<smem>>
    %342 = vector.extract_strided_slice %6 {offsets = [0, 22], sizes = [2, 256], strides = [1, 1]} : vector<2x358xf32> to vector<2x256xf32>
    %343 = vector.broadcast %341 : f32 to vector<2x256xf32>
    %344 = arith.mulf %343, %342 : vector<2x256xf32>
    %345 = arith.addf %340, %344 : vector<2x256xf32>
    %c20 = arith.constant 20 : index
    %346 = memref.load %arg1[%c20] : memref<98xf32, #tpu.memory_space<smem>>
    %347 = vector.extract_strided_slice %6 {offsets = [0, 38], sizes = [2, 256], strides = [1, 1]} : vector<2x358xf32> to vector<2x256xf32>
    %348 = vector.broadcast %346 : f32 to vector<2x256xf32>
    %349 = arith.mulf %348, %347 : vector<2x256xf32>
    %350 = arith.addf %345, %349 : vector<2x256xf32>
    %c27 = arith.constant 27 : index
    %351 = memref.load %arg1[%c27] : memref<98xf32, #tpu.memory_space<smem>>
    %352 = vector.extract_strided_slice %6 {offsets = [0, 54], sizes = [2, 256], strides = [1, 1]} : vector<2x358xf32> to vector<2x256xf32>
    %353 = vector.broadcast %351 : f32 to vector<2x256xf32>
    %354 = arith.mulf %353, %352 : vector<2x256xf32>
    %355 = arith.addf %350, %354 : vector<2x256xf32>
    %c34 = arith.constant 34 : index
    %356 = memref.load %arg1[%c34] : memref<98xf32, #tpu.memory_space<smem>>
    %357 = vector.extract_strided_slice %6 {offsets = [0, 70], sizes = [2, 256], strides = [1, 1]} : vector<2x358xf32> to vector<2x256xf32>
    %358 = vector.broadcast %356 : f32 to vector<2x256xf32>
    %359 = arith.mulf %358, %357 : vector<2x256xf32>
    %360 = arith.addf %355, %359 : vector<2x256xf32>
    %c41 = arith.constant 41 : index
    %361 = memref.load %arg1[%c41] : memref<98xf32, #tpu.memory_space<smem>>
    %362 = vector.extract_strided_slice %6 {offsets = [0, 86], sizes = [2, 256], strides = [1, 1]} : vector<2x358xf32> to vector<2x256xf32>
    %363 = vector.broadcast %361 : f32 to vector<2x256xf32>
    %364 = arith.mulf %363, %362 : vector<2x256xf32>
    %365 = arith.addf %360, %364 : vector<2x256xf32>
    %c48 = arith.constant 48 : index
    %366 = memref.load %arg1[%c48] : memref<98xf32, #tpu.memory_space<smem>>
    %367 = vector.extract_strided_slice %6 {offsets = [0, 102], sizes = [2, 256], strides = [1, 1]} : vector<2x358xf32> to vector<2x256xf32>
    %368 = vector.broadcast %366 : f32 to vector<2x256xf32>
    %369 = arith.mulf %368, %367 : vector<2x256xf32>
    %370 = arith.addf %365, %369 : vector<2x256xf32>
    %cst_46 = arith.constant 0.000000e+00 : f32
    %371 = vector.shape_cast %87 : vector<1x256xi1> to vector<1x256xi1>
    %372 = vector.broadcast %371 : vector<1x256xi1> to vector<2x256xi1>
    %373 = vector.broadcast %cst_46 : f32 to vector<2x256xf32>
    %374 = arith.select %372, %370, %373 : vector<2x256xi1>, vector<2x256xf32>
    %375 = arith.addf %334, %374 : vector<2x256xf32>
    %cst_47 = arith.constant 0.000000e+00 : f32
    %376 = vector.broadcast %cst_47 : f32 to vector<2x256xf32>
    %c49 = arith.constant 49 : index
    %377 = memref.load %arg1[%c49] : memref<98xf32, #tpu.memory_space<smem>>
    %378 = vector.extract_strided_slice %7 {offsets = [0, 0], sizes = [2, 256], strides = [1, 1]} : vector<2x358xf32> to vector<2x256xf32>
    %379 = vector.broadcast %377 : f32 to vector<2x256xf32>
    %380 = arith.mulf %379, %378 : vector<2x256xf32>
    %381 = arith.addf %376, %380 : vector<2x256xf32>
    %c56 = arith.constant 56 : index
    %382 = memref.load %arg1[%c56] : memref<98xf32, #tpu.memory_space<smem>>
    %383 = vector.extract_strided_slice %7 {offsets = [0, 16], sizes = [2, 256], strides = [1, 1]} : vector<2x358xf32> to vector<2x256xf32>
    %384 = vector.broadcast %382 : f32 to vector<2x256xf32>
    %385 = arith.mulf %384, %383 : vector<2x256xf32>
    %386 = arith.addf %381, %385 : vector<2x256xf32>
    %c63 = arith.constant 63 : index
    %387 = memref.load %arg1[%c63] : memref<98xf32, #tpu.memory_space<smem>>
    %388 = vector.extract_strided_slice %7 {offsets = [0, 32], sizes = [2, 256], strides = [1, 1]} : vector<2x358xf32> to vector<2x256xf32>
    %389 = vector.broadcast %387 : f32 to vector<2x256xf32>
    %390 = arith.mulf %389, %388 : vector<2x256xf32>
    %391 = arith.addf %386, %390 : vector<2x256xf32>
    %c70 = arith.constant 70 : index
    %392 = memref.load %arg1[%c70] : memref<98xf32, #tpu.memory_space<smem>>
    %393 = vector.extract_strided_slice %7 {offsets = [0, 48], sizes = [2, 256], strides = [1, 1]} : vector<2x358xf32> to vector<2x256xf32>
    %394 = vector.broadcast %392 : f32 to vector<2x256xf32>
    %395 = arith.mulf %394, %393 : vector<2x256xf32>
    %396 = arith.addf %391, %395 : vector<2x256xf32>
    %c77 = arith.constant 77 : index
    %397 = memref.load %arg1[%c77] : memref<98xf32, #tpu.memory_space<smem>>
    %398 = vector.extract_strided_slice %7 {offsets = [0, 64], sizes = [2, 256], strides = [1, 1]} : vector<2x358xf32> to vector<2x256xf32>
    %399 = vector.broadcast %397 : f32 to vector<2x256xf32>
    %400 = arith.mulf %399, %398 : vector<2x256xf32>
    %401 = arith.addf %396, %400 : vector<2x256xf32>
    %c84 = arith.constant 84 : index
    %402 = memref.load %arg1[%c84] : memref<98xf32, #tpu.memory_space<smem>>
    %403 = vector.extract_strided_slice %7 {offsets = [0, 80], sizes = [2, 256], strides = [1, 1]} : vector<2x358xf32> to vector<2x256xf32>
    %404 = vector.broadcast %402 : f32 to vector<2x256xf32>
    %405 = arith.mulf %404, %403 : vector<2x256xf32>
    %406 = arith.addf %401, %405 : vector<2x256xf32>
    %c91 = arith.constant 91 : index
    %407 = memref.load %arg1[%c91] : memref<98xf32, #tpu.memory_space<smem>>
    %408 = vector.extract_strided_slice %7 {offsets = [0, 96], sizes = [2, 256], strides = [1, 1]} : vector<2x358xf32> to vector<2x256xf32>
    %409 = vector.broadcast %407 : f32 to vector<2x256xf32>
    %410 = arith.mulf %409, %408 : vector<2x256xf32>
    %411 = arith.addf %406, %410 : vector<2x256xf32>
    %cst_48 = arith.constant 0.000000e+00 : f32
    %412 = vector.shape_cast %33 : vector<1x256xi1> to vector<1x256xi1>
    %413 = vector.broadcast %412 : vector<1x256xi1> to vector<2x256xi1>
    %414 = vector.broadcast %cst_48 : f32 to vector<2x256xf32>
    %415 = arith.select %413, %411, %414 : vector<2x256xi1>, vector<2x256xf32>
    %416 = arith.addf %375, %415 : vector<2x256xf32>
    %cst_49 = arith.constant 0.000000e+00 : f32
    %417 = vector.broadcast %cst_49 : f32 to vector<2x256xf32>
    %c50 = arith.constant 50 : index
    %418 = memref.load %arg1[%c50] : memref<98xf32, #tpu.memory_space<smem>>
    %419 = vector.extract_strided_slice %7 {offsets = [0, 1], sizes = [2, 256], strides = [1, 1]} : vector<2x358xf32> to vector<2x256xf32>
    %420 = vector.broadcast %418 : f32 to vector<2x256xf32>
    %421 = arith.mulf %420, %419 : vector<2x256xf32>
    %422 = arith.addf %417, %421 : vector<2x256xf32>
    %c57 = arith.constant 57 : index
    %423 = memref.load %arg1[%c57] : memref<98xf32, #tpu.memory_space<smem>>
    %424 = vector.extract_strided_slice %7 {offsets = [0, 17], sizes = [2, 256], strides = [1, 1]} : vector<2x358xf32> to vector<2x256xf32>
    %425 = vector.broadcast %423 : f32 to vector<2x256xf32>
    %426 = arith.mulf %425, %424 : vector<2x256xf32>
    %427 = arith.addf %422, %426 : vector<2x256xf32>
    %c64 = arith.constant 64 : index
    %428 = memref.load %arg1[%c64] : memref<98xf32, #tpu.memory_space<smem>>
    %429 = vector.extract_strided_slice %7 {offsets = [0, 33], sizes = [2, 256], strides = [1, 1]} : vector<2x358xf32> to vector<2x256xf32>
    %430 = vector.broadcast %428 : f32 to vector<2x256xf32>
    %431 = arith.mulf %430, %429 : vector<2x256xf32>
    %432 = arith.addf %427, %431 : vector<2x256xf32>
    %c71 = arith.constant 71 : index
    %433 = memref.load %arg1[%c71] : memref<98xf32, #tpu.memory_space<smem>>
    %434 = vector.extract_strided_slice %7 {offsets = [0, 49], sizes = [2, 256], strides = [1, 1]} : vector<2x358xf32> to vector<2x256xf32>
    %435 = vector.broadcast %433 : f32 to vector<2x256xf32>
    %436 = arith.mulf %435, %434 : vector<2x256xf32>
    %437 = arith.addf %432, %436 : vector<2x256xf32>
    %c78 = arith.constant 78 : index
    %438 = memref.load %arg1[%c78] : memref<98xf32, #tpu.memory_space<smem>>
    %439 = vector.extract_strided_slice %7 {offsets = [0, 65], sizes = [2, 256], strides = [1, 1]} : vector<2x358xf32> to vector<2x256xf32>
    %440 = vector.broadcast %438 : f32 to vector<2x256xf32>
    %441 = arith.mulf %440, %439 : vector<2x256xf32>
    %442 = arith.addf %437, %441 : vector<2x256xf32>
    %c85 = arith.constant 85 : index
    %443 = memref.load %arg1[%c85] : memref<98xf32, #tpu.memory_space<smem>>
    %444 = vector.extract_strided_slice %7 {offsets = [0, 81], sizes = [2, 256], strides = [1, 1]} : vector<2x358xf32> to vector<2x256xf32>
    %445 = vector.broadcast %443 : f32 to vector<2x256xf32>
    %446 = arith.mulf %445, %444 : vector<2x256xf32>
    %447 = arith.addf %442, %446 : vector<2x256xf32>
    %c92 = arith.constant 92 : index
    %448 = memref.load %arg1[%c92] : memref<98xf32, #tpu.memory_space<smem>>
    %449 = vector.extract_strided_slice %7 {offsets = [0, 97], sizes = [2, 256], strides = [1, 1]} : vector<2x358xf32> to vector<2x256xf32>
    %450 = vector.broadcast %448 : f32 to vector<2x256xf32>
    %451 = arith.mulf %450, %449 : vector<2x256xf32>
    %452 = arith.addf %447, %451 : vector<2x256xf32>
    %cst_50 = arith.constant 0.000000e+00 : f32
    %453 = vector.shape_cast %42 : vector<1x256xi1> to vector<1x256xi1>
    %454 = vector.broadcast %453 : vector<1x256xi1> to vector<2x256xi1>
    %455 = vector.broadcast %cst_50 : f32 to vector<2x256xf32>
    %456 = arith.select %454, %452, %455 : vector<2x256xi1>, vector<2x256xf32>
    %457 = arith.addf %416, %456 : vector<2x256xf32>
    %cst_51 = arith.constant 0.000000e+00 : f32
    %458 = vector.broadcast %cst_51 : f32 to vector<2x256xf32>
    %c51 = arith.constant 51 : index
    %459 = memref.load %arg1[%c51] : memref<98xf32, #tpu.memory_space<smem>>
    %460 = vector.extract_strided_slice %7 {offsets = [0, 2], sizes = [2, 256], strides = [1, 1]} : vector<2x358xf32> to vector<2x256xf32>
    %461 = vector.broadcast %459 : f32 to vector<2x256xf32>
    %462 = arith.mulf %461, %460 : vector<2x256xf32>
    %463 = arith.addf %458, %462 : vector<2x256xf32>
    %c58 = arith.constant 58 : index
    %464 = memref.load %arg1[%c58] : memref<98xf32, #tpu.memory_space<smem>>
    %465 = vector.extract_strided_slice %7 {offsets = [0, 18], sizes = [2, 256], strides = [1, 1]} : vector<2x358xf32> to vector<2x256xf32>
    %466 = vector.broadcast %464 : f32 to vector<2x256xf32>
    %467 = arith.mulf %466, %465 : vector<2x256xf32>
    %468 = arith.addf %463, %467 : vector<2x256xf32>
    %c65 = arith.constant 65 : index
    %469 = memref.load %arg1[%c65] : memref<98xf32, #tpu.memory_space<smem>>
    %470 = vector.extract_strided_slice %7 {offsets = [0, 34], sizes = [2, 256], strides = [1, 1]} : vector<2x358xf32> to vector<2x256xf32>
    %471 = vector.broadcast %469 : f32 to vector<2x256xf32>
    %472 = arith.mulf %471, %470 : vector<2x256xf32>
    %473 = arith.addf %468, %472 : vector<2x256xf32>
    %c72 = arith.constant 72 : index
    %474 = memref.load %arg1[%c72] : memref<98xf32, #tpu.memory_space<smem>>
    %475 = vector.extract_strided_slice %7 {offsets = [0, 50], sizes = [2, 256], strides = [1, 1]} : vector<2x358xf32> to vector<2x256xf32>
    %476 = vector.broadcast %474 : f32 to vector<2x256xf32>
    %477 = arith.mulf %476, %475 : vector<2x256xf32>
    %478 = arith.addf %473, %477 : vector<2x256xf32>
    %c79 = arith.constant 79 : index
    %479 = memref.load %arg1[%c79] : memref<98xf32, #tpu.memory_space<smem>>
    %480 = vector.extract_strided_slice %7 {offsets = [0, 66], sizes = [2, 256], strides = [1, 1]} : vector<2x358xf32> to vector<2x256xf32>
    %481 = vector.broadcast %479 : f32 to vector<2x256xf32>
    %482 = arith.mulf %481, %480 : vector<2x256xf32>
    %483 = arith.addf %478, %482 : vector<2x256xf32>
    %c86 = arith.constant 86 : index
    %484 = memref.load %arg1[%c86] : memref<98xf32, #tpu.memory_space<smem>>
    %485 = vector.extract_strided_slice %7 {offsets = [0, 82], sizes = [2, 256], strides = [1, 1]} : vector<2x358xf32> to vector<2x256xf32>
    %486 = vector.broadcast %484 : f32 to vector<2x256xf32>
    %487 = arith.mulf %486, %485 : vector<2x256xf32>
    %488 = arith.addf %483, %487 : vector<2x256xf32>
    %c93 = arith.constant 93 : index
    %489 = memref.load %arg1[%c93] : memref<98xf32, #tpu.memory_space<smem>>
    %490 = vector.extract_strided_slice %7 {offsets = [0, 98], sizes = [2, 256], strides = [1, 1]} : vector<2x358xf32> to vector<2x256xf32>
    %491 = vector.broadcast %489 : f32 to vector<2x256xf32>
    %492 = arith.mulf %491, %490 : vector<2x256xf32>
    %493 = arith.addf %488, %492 : vector<2x256xf32>
    %cst_52 = arith.constant 0.000000e+00 : f32
    %494 = vector.shape_cast %51 : vector<1x256xi1> to vector<1x256xi1>
    %495 = vector.broadcast %494 : vector<1x256xi1> to vector<2x256xi1>
    %496 = vector.broadcast %cst_52 : f32 to vector<2x256xf32>
    %497 = arith.select %495, %493, %496 : vector<2x256xi1>, vector<2x256xf32>
    %498 = arith.addf %457, %497 : vector<2x256xf32>
    %cst_53 = arith.constant 0.000000e+00 : f32
    %499 = vector.broadcast %cst_53 : f32 to vector<2x256xf32>
    %c52 = arith.constant 52 : index
    %500 = memref.load %arg1[%c52] : memref<98xf32, #tpu.memory_space<smem>>
    %501 = vector.extract_strided_slice %7 {offsets = [0, 3], sizes = [2, 256], strides = [1, 1]} : vector<2x358xf32> to vector<2x256xf32>
    %502 = vector.broadcast %500 : f32 to vector<2x256xf32>
    %503 = arith.mulf %502, %501 : vector<2x256xf32>
    %504 = arith.addf %499, %503 : vector<2x256xf32>
    %c59 = arith.constant 59 : index
    %505 = memref.load %arg1[%c59] : memref<98xf32, #tpu.memory_space<smem>>
    %506 = vector.extract_strided_slice %7 {offsets = [0, 19], sizes = [2, 256], strides = [1, 1]} : vector<2x358xf32> to vector<2x256xf32>
    %507 = vector.broadcast %505 : f32 to vector<2x256xf32>
    %508 = arith.mulf %507, %506 : vector<2x256xf32>
    %509 = arith.addf %504, %508 : vector<2x256xf32>
    %c66 = arith.constant 66 : index
    %510 = memref.load %arg1[%c66] : memref<98xf32, #tpu.memory_space<smem>>
    %511 = vector.extract_strided_slice %7 {offsets = [0, 35], sizes = [2, 256], strides = [1, 1]} : vector<2x358xf32> to vector<2x256xf32>
    %512 = vector.broadcast %510 : f32 to vector<2x256xf32>
    %513 = arith.mulf %512, %511 : vector<2x256xf32>
    %514 = arith.addf %509, %513 : vector<2x256xf32>
    %c73 = arith.constant 73 : index
    %515 = memref.load %arg1[%c73] : memref<98xf32, #tpu.memory_space<smem>>
    %516 = vector.extract_strided_slice %7 {offsets = [0, 51], sizes = [2, 256], strides = [1, 1]} : vector<2x358xf32> to vector<2x256xf32>
    %517 = vector.broadcast %515 : f32 to vector<2x256xf32>
    %518 = arith.mulf %517, %516 : vector<2x256xf32>
    %519 = arith.addf %514, %518 : vector<2x256xf32>
    %c80 = arith.constant 80 : index
    %520 = memref.load %arg1[%c80] : memref<98xf32, #tpu.memory_space<smem>>
    %521 = vector.extract_strided_slice %7 {offsets = [0, 67], sizes = [2, 256], strides = [1, 1]} : vector<2x358xf32> to vector<2x256xf32>
    %522 = vector.broadcast %520 : f32 to vector<2x256xf32>
    %523 = arith.mulf %522, %521 : vector<2x256xf32>
    %524 = arith.addf %519, %523 : vector<2x256xf32>
    %c87 = arith.constant 87 : index
    %525 = memref.load %arg1[%c87] : memref<98xf32, #tpu.memory_space<smem>>
    %526 = vector.extract_strided_slice %7 {offsets = [0, 83], sizes = [2, 256], strides = [1, 1]} : vector<2x358xf32> to vector<2x256xf32>
    %527 = vector.broadcast %525 : f32 to vector<2x256xf32>
    %528 = arith.mulf %527, %526 : vector<2x256xf32>
    %529 = arith.addf %524, %528 : vector<2x256xf32>
    %c94 = arith.constant 94 : index
    %530 = memref.load %arg1[%c94] : memref<98xf32, #tpu.memory_space<smem>>
    %531 = vector.extract_strided_slice %7 {offsets = [0, 99], sizes = [2, 256], strides = [1, 1]} : vector<2x358xf32> to vector<2x256xf32>
    %532 = vector.broadcast %530 : f32 to vector<2x256xf32>
    %533 = arith.mulf %532, %531 : vector<2x256xf32>
    %534 = arith.addf %529, %533 : vector<2x256xf32>
    %cst_54 = arith.constant 0.000000e+00 : f32
    %535 = vector.shape_cast %60 : vector<1x256xi1> to vector<1x256xi1>
    %536 = vector.broadcast %535 : vector<1x256xi1> to vector<2x256xi1>
    %537 = vector.broadcast %cst_54 : f32 to vector<2x256xf32>
    %538 = arith.select %536, %534, %537 : vector<2x256xi1>, vector<2x256xf32>
    %539 = arith.addf %498, %538 : vector<2x256xf32>
    %cst_55 = arith.constant 0.000000e+00 : f32
    %540 = vector.broadcast %cst_55 : f32 to vector<2x256xf32>
    %c53 = arith.constant 53 : index
    %541 = memref.load %arg1[%c53] : memref<98xf32, #tpu.memory_space<smem>>
    %542 = vector.extract_strided_slice %7 {offsets = [0, 4], sizes = [2, 256], strides = [1, 1]} : vector<2x358xf32> to vector<2x256xf32>
    %543 = vector.broadcast %541 : f32 to vector<2x256xf32>
    %544 = arith.mulf %543, %542 : vector<2x256xf32>
    %545 = arith.addf %540, %544 : vector<2x256xf32>
    %c60 = arith.constant 60 : index
    %546 = memref.load %arg1[%c60] : memref<98xf32, #tpu.memory_space<smem>>
    %547 = vector.extract_strided_slice %7 {offsets = [0, 20], sizes = [2, 256], strides = [1, 1]} : vector<2x358xf32> to vector<2x256xf32>
    %548 = vector.broadcast %546 : f32 to vector<2x256xf32>
    %549 = arith.mulf %548, %547 : vector<2x256xf32>
    %550 = arith.addf %545, %549 : vector<2x256xf32>
    %c67 = arith.constant 67 : index
    %551 = memref.load %arg1[%c67] : memref<98xf32, #tpu.memory_space<smem>>
    %552 = vector.extract_strided_slice %7 {offsets = [0, 36], sizes = [2, 256], strides = [1, 1]} : vector<2x358xf32> to vector<2x256xf32>
    %553 = vector.broadcast %551 : f32 to vector<2x256xf32>
    %554 = arith.mulf %553, %552 : vector<2x256xf32>
    %555 = arith.addf %550, %554 : vector<2x256xf32>
    %c74 = arith.constant 74 : index
    %556 = memref.load %arg1[%c74] : memref<98xf32, #tpu.memory_space<smem>>
    %557 = vector.extract_strided_slice %7 {offsets = [0, 52], sizes = [2, 256], strides = [1, 1]} : vector<2x358xf32> to vector<2x256xf32>
    %558 = vector.broadcast %556 : f32 to vector<2x256xf32>
    %559 = arith.mulf %558, %557 : vector<2x256xf32>
    %560 = arith.addf %555, %559 : vector<2x256xf32>
    %c81 = arith.constant 81 : index
    %561 = memref.load %arg1[%c81] : memref<98xf32, #tpu.memory_space<smem>>
    %562 = vector.extract_strided_slice %7 {offsets = [0, 68], sizes = [2, 256], strides = [1, 1]} : vector<2x358xf32> to vector<2x256xf32>
    %563 = vector.broadcast %561 : f32 to vector<2x256xf32>
    %564 = arith.mulf %563, %562 : vector<2x256xf32>
    %565 = arith.addf %560, %564 : vector<2x256xf32>
    %c88 = arith.constant 88 : index
    %566 = memref.load %arg1[%c88] : memref<98xf32, #tpu.memory_space<smem>>
    %567 = vector.extract_strided_slice %7 {offsets = [0, 84], sizes = [2, 256], strides = [1, 1]} : vector<2x358xf32> to vector<2x256xf32>
    %568 = vector.broadcast %566 : f32 to vector<2x256xf32>
    %569 = arith.mulf %568, %567 : vector<2x256xf32>
    %570 = arith.addf %565, %569 : vector<2x256xf32>
    %c95 = arith.constant 95 : index
    %571 = memref.load %arg1[%c95] : memref<98xf32, #tpu.memory_space<smem>>
    %572 = vector.extract_strided_slice %7 {offsets = [0, 100], sizes = [2, 256], strides = [1, 1]} : vector<2x358xf32> to vector<2x256xf32>
    %573 = vector.broadcast %571 : f32 to vector<2x256xf32>
    %574 = arith.mulf %573, %572 : vector<2x256xf32>
    %575 = arith.addf %570, %574 : vector<2x256xf32>
    %cst_56 = arith.constant 0.000000e+00 : f32
    %576 = vector.shape_cast %69 : vector<1x256xi1> to vector<1x256xi1>
    %577 = vector.broadcast %576 : vector<1x256xi1> to vector<2x256xi1>
    %578 = vector.broadcast %cst_56 : f32 to vector<2x256xf32>
    %579 = arith.select %577, %575, %578 : vector<2x256xi1>, vector<2x256xf32>
    %580 = arith.addf %539, %579 : vector<2x256xf32>
    %cst_57 = arith.constant 0.000000e+00 : f32
    %581 = vector.broadcast %cst_57 : f32 to vector<2x256xf32>
    %c54 = arith.constant 54 : index
    %582 = memref.load %arg1[%c54] : memref<98xf32, #tpu.memory_space<smem>>
    %583 = vector.extract_strided_slice %7 {offsets = [0, 5], sizes = [2, 256], strides = [1, 1]} : vector<2x358xf32> to vector<2x256xf32>
    %584 = vector.broadcast %582 : f32 to vector<2x256xf32>
    %585 = arith.mulf %584, %583 : vector<2x256xf32>
    %586 = arith.addf %581, %585 : vector<2x256xf32>
    %c61 = arith.constant 61 : index
    %587 = memref.load %arg1[%c61] : memref<98xf32, #tpu.memory_space<smem>>
    %588 = vector.extract_strided_slice %7 {offsets = [0, 21], sizes = [2, 256], strides = [1, 1]} : vector<2x358xf32> to vector<2x256xf32>
    %589 = vector.broadcast %587 : f32 to vector<2x256xf32>
    %590 = arith.mulf %589, %588 : vector<2x256xf32>
    %591 = arith.addf %586, %590 : vector<2x256xf32>
    %c68 = arith.constant 68 : index
    %592 = memref.load %arg1[%c68] : memref<98xf32, #tpu.memory_space<smem>>
    %593 = vector.extract_strided_slice %7 {offsets = [0, 37], sizes = [2, 256], strides = [1, 1]} : vector<2x358xf32> to vector<2x256xf32>
    %594 = vector.broadcast %592 : f32 to vector<2x256xf32>
    %595 = arith.mulf %594, %593 : vector<2x256xf32>
    %596 = arith.addf %591, %595 : vector<2x256xf32>
    %c75 = arith.constant 75 : index
    %597 = memref.load %arg1[%c75] : memref<98xf32, #tpu.memory_space<smem>>
    %598 = vector.extract_strided_slice %7 {offsets = [0, 53], sizes = [2, 256], strides = [1, 1]} : vector<2x358xf32> to vector<2x256xf32>
    %599 = vector.broadcast %597 : f32 to vector<2x256xf32>
    %600 = arith.mulf %599, %598 : vector<2x256xf32>
    %601 = arith.addf %596, %600 : vector<2x256xf32>
    %c82 = arith.constant 82 : index
    %602 = memref.load %arg1[%c82] : memref<98xf32, #tpu.memory_space<smem>>
    %603 = vector.extract_strided_slice %7 {offsets = [0, 69], sizes = [2, 256], strides = [1, 1]} : vector<2x358xf32> to vector<2x256xf32>
    %604 = vector.broadcast %602 : f32 to vector<2x256xf32>
    %605 = arith.mulf %604, %603 : vector<2x256xf32>
    %606 = arith.addf %601, %605 : vector<2x256xf32>
    %c89 = arith.constant 89 : index
    %607 = memref.load %arg1[%c89] : memref<98xf32, #tpu.memory_space<smem>>
    %608 = vector.extract_strided_slice %7 {offsets = [0, 85], sizes = [2, 256], strides = [1, 1]} : vector<2x358xf32> to vector<2x256xf32>
    %609 = vector.broadcast %607 : f32 to vector<2x256xf32>
    %610 = arith.mulf %609, %608 : vector<2x256xf32>
    %611 = arith.addf %606, %610 : vector<2x256xf32>
    %c96 = arith.constant 96 : index
    %612 = memref.load %arg1[%c96] : memref<98xf32, #tpu.memory_space<smem>>
    %613 = vector.extract_strided_slice %7 {offsets = [0, 101], sizes = [2, 256], strides = [1, 1]} : vector<2x358xf32> to vector<2x256xf32>
    %614 = vector.broadcast %612 : f32 to vector<2x256xf32>
    %615 = arith.mulf %614, %613 : vector<2x256xf32>
    %616 = arith.addf %611, %615 : vector<2x256xf32>
    %cst_58 = arith.constant 0.000000e+00 : f32
    %617 = vector.shape_cast %78 : vector<1x256xi1> to vector<1x256xi1>
    %618 = vector.broadcast %617 : vector<1x256xi1> to vector<2x256xi1>
    %619 = vector.broadcast %cst_58 : f32 to vector<2x256xf32>
    %620 = arith.select %618, %616, %619 : vector<2x256xi1>, vector<2x256xf32>
    %621 = arith.addf %580, %620 : vector<2x256xf32>
    %cst_59 = arith.constant 0.000000e+00 : f32
    %622 = vector.broadcast %cst_59 : f32 to vector<2x256xf32>
    %c55 = arith.constant 55 : index
    %623 = memref.load %arg1[%c55] : memref<98xf32, #tpu.memory_space<smem>>
    %624 = vector.extract_strided_slice %7 {offsets = [0, 6], sizes = [2, 256], strides = [1, 1]} : vector<2x358xf32> to vector<2x256xf32>
    %625 = vector.broadcast %623 : f32 to vector<2x256xf32>
    %626 = arith.mulf %625, %624 : vector<2x256xf32>
    %627 = arith.addf %622, %626 : vector<2x256xf32>
    %c62 = arith.constant 62 : index
    %628 = memref.load %arg1[%c62] : memref<98xf32, #tpu.memory_space<smem>>
    %629 = vector.extract_strided_slice %7 {offsets = [0, 22], sizes = [2, 256], strides = [1, 1]} : vector<2x358xf32> to vector<2x256xf32>
    %630 = vector.broadcast %628 : f32 to vector<2x256xf32>
    %631 = arith.mulf %630, %629 : vector<2x256xf32>
    %632 = arith.addf %627, %631 : vector<2x256xf32>
    %c69 = arith.constant 69 : index
    %633 = memref.load %arg1[%c69] : memref<98xf32, #tpu.memory_space<smem>>
    %634 = vector.extract_strided_slice %7 {offsets = [0, 38], sizes = [2, 256], strides = [1, 1]} : vector<2x358xf32> to vector<2x256xf32>
    %635 = vector.broadcast %633 : f32 to vector<2x256xf32>
    %636 = arith.mulf %635, %634 : vector<2x256xf32>
    %637 = arith.addf %632, %636 : vector<2x256xf32>
    %c76 = arith.constant 76 : index
    %638 = memref.load %arg1[%c76] : memref<98xf32, #tpu.memory_space<smem>>
    %639 = vector.extract_strided_slice %7 {offsets = [0, 54], sizes = [2, 256], strides = [1, 1]} : vector<2x358xf32> to vector<2x256xf32>
    %640 = vector.broadcast %638 : f32 to vector<2x256xf32>
    %641 = arith.mulf %640, %639 : vector<2x256xf32>
    %642 = arith.addf %637, %641 : vector<2x256xf32>
    %c83 = arith.constant 83 : index
    %643 = memref.load %arg1[%c83] : memref<98xf32, #tpu.memory_space<smem>>
    %644 = vector.extract_strided_slice %7 {offsets = [0, 70], sizes = [2, 256], strides = [1, 1]} : vector<2x358xf32> to vector<2x256xf32>
    %645 = vector.broadcast %643 : f32 to vector<2x256xf32>
    %646 = arith.mulf %645, %644 : vector<2x256xf32>
    %647 = arith.addf %642, %646 : vector<2x256xf32>
    %c90 = arith.constant 90 : index
    %648 = memref.load %arg1[%c90] : memref<98xf32, #tpu.memory_space<smem>>
    %649 = vector.extract_strided_slice %7 {offsets = [0, 86], sizes = [2, 256], strides = [1, 1]} : vector<2x358xf32> to vector<2x256xf32>
    %650 = vector.broadcast %648 : f32 to vector<2x256xf32>
    %651 = arith.mulf %650, %649 : vector<2x256xf32>
    %652 = arith.addf %647, %651 : vector<2x256xf32>
    %c97 = arith.constant 97 : index
    %653 = memref.load %arg1[%c97] : memref<98xf32, #tpu.memory_space<smem>>
    %654 = vector.extract_strided_slice %7 {offsets = [0, 102], sizes = [2, 256], strides = [1, 1]} : vector<2x358xf32> to vector<2x256xf32>
    %655 = vector.broadcast %653 : f32 to vector<2x256xf32>
    %656 = arith.mulf %655, %654 : vector<2x256xf32>
    %657 = arith.addf %652, %656 : vector<2x256xf32>
    %cst_60 = arith.constant 0.000000e+00 : f32
    %658 = vector.shape_cast %87 : vector<1x256xi1> to vector<1x256xi1>
    %659 = vector.broadcast %658 : vector<1x256xi1> to vector<2x256xi1>
    %660 = vector.broadcast %cst_60 : f32 to vector<2x256xf32>
    %661 = arith.select %659, %657, %660 : vector<2x256xi1>, vector<2x256xf32>
    %662 = arith.addf %621, %661 : vector<2x256xf32>
    %663 = arith.negf %662 : vector<2x256xf32>
    %664 = math.exp %663 : vector<2x256xf32>
    %cst_61 = arith.constant 1.000000e+00 : f32
    %665 = vector.broadcast %cst_61 : f32 to vector<2x256xf32>
    %666 = arith.addf %665, %664 : vector<2x256xf32>
    %667 = arith.divf %665, %666 : vector<2x256xf32>
    %c0_62 = arith.constant 0 : index
    %c0_63 = arith.constant 0 : index
    %668 = vector.load %arg3[%c0_62, %c0_63] : memref<2x256xf32, #tpu.memory_space<vmem>>, vector<2x256xf32>
    tpu.vector_store %arg3[%c0_62, %c0_63], %667 {strides = array<i32>} : memref<2x256xf32, #tpu.memory_space<vmem>>, vector<2x256xf32>,
    return
  }
  func.func @transform_0(%arg0: i32) -> i32 {
    %c0_i32 = arith.constant 0 : i32
    %c0_i32_0 = arith.constant 0 : i32
    return %c0_i32 : i32
  }
  func.func @transform_1(%arg0: i32) -> (i32, i32, i32) {
    %c0_i32 = arith.constant 0 : i32
    %c0_i32_0 = arith.constant 0 : i32
    %c0_i32_1 = arith.constant 0 : i32
    return %arg0, %c0_i32, %c0_i32_0 : i32, i32, i32
  }
  func.func @transform_2(%arg0: i32) -> (i32, i32) {
    %c0_i32 = arith.constant 0 : i32
    %c0_i32_0 = arith.constant 0 : i32
    return %arg0, %c0_i32 : i32, i32
  }
}

</mosaic_0001>

<llo_original>
// kernel: tpu_custom_call.1
$region0: #{tpu_custom_call.1}
  #allocation0 [shape = 'u32[]', space=smem, size = 0x4, offset = 0x4, fixed_abs, tag = 'smem constant byte address 0x4 - core index']
  #allocation1 [shape = 'u32[144,128]{1,0:T(1,128)}', space=vmem, size = 0x12000, scoped, tag = 'internal scratch']
  %s0 = inlined_call_operand.hbm [shape: f32[98], index: 0, kind: input, shape index: {}]
  %s1 = inlined_call_operand.hbm [shape: f32[2,4,256], index: 1, kind: input, shape index: {}]
  %s2 = inlined_call_operand.hbm [shape: f32[2,256], index: 2, kind: output, shape index: {}]
  %s3 = sld [smem:[#allocation0]]
  $region26: #{tpu_custom_call.1} parent=0
    _
  %s5 = ssub.s32 1, %s3
  %s6 = scalar_select 0, %s5, %s3
  $region1: #{tpu_custom_call.1} parent=0
    #allocation2 [shape = 'u8[512]{0}', space=smem, size = 0x200, scoped, tag = 'input window, operand 0, single buffered']
    #allocation3 [shape = 's32[1]{0}', space=sflag, size = 0x4, scoped, tag = 'scoped memory for tpu_custom_call.1']
    #allocation4 [shape = 's32[1]{0}', space=sflag, size = 0x4, scoped, tag = 'scoped memory for tpu_custom_call.1']
    #allocation5 [shape = 's32[1]{0}', space=sflag, size = 0x4, scoped, tag = 'scoped memory for tpu_custom_call.1']
    #allocation6 [shape = 'u8[8192]{0}', space=vmem, size = 0x2000, scoped, tag = 'input window, operand 1, single buffered']
    #allocation7 [shape = 'u8[2048]{0}', space=vmem, size = 0x800, scoped, tag = 'output window, operand 0, single buffered']
    %7 = vsyncpa [#allocation5], 0
    %8 = vsyncpa [#allocation3], 0
    %9 = vsyncpa [#allocation4], 0
    // Predicated region
    $region2: #{tpu_custom_call.1} parent=1 // pred_check
      _
    $region3: #{tpu_custom_call.1} parent=1 // pred_check_branch
      %11 = sbr.rel (0) target = $region5
    $region4: #{tpu_custom_call.1} parent=1 // pred_region
      %s13 = ssub.s32 16, 16
      %14 = vsyncadd [#allocation5], %s13
      %17 = dma.hbm_to_smem %s0, 16, [#allocation2], [#allocation5]
    $region5: #{tpu_custom_call.1} parent=1 // pred_fallthru
      _
    // Predicated region
    $region6: #{tpu_custom_call.1} parent=1 // pred_check
      _
    $region7: #{tpu_custom_call.1} parent=1 // pred_check_branch
      %19 = sbr.rel (0) target = $region9
    $region8: #{tpu_custom_call.1} parent=1 // pred_region
      %s21 = ssub.s32 256, 256
      %22 = vsyncadd [#allocation3], %s21
      %s23 = sshll.u32 [#allocation6], 4
      %s24 = int_to_ptr.vmem [resolvable:$true] %s23
      %29 = dma.hbm_to_vmem [thread:$0]  %s1, 256, %s24, [#allocation3], 128, 128, 8
    $region9: #{tpu_custom_call.1} parent=1 // pred_fallthru
      _
    // Predicated region
    $region10: #{tpu_custom_call.1} parent=1 // pred_check
      _
    $region11: #{tpu_custom_call.1} parent=1 // pred_check_branch
      %31 = sbr.rel (0) target = $region13
    $region12: #{tpu_custom_call.1} parent=1 // pred_region
      %32 = dma.done [#allocation5], 16
    $region13: #{tpu_custom_call.1} parent=1 // pred_fallthru
      _
    // Predicated region
    $region14: #{tpu_custom_call.1} parent=1 // pred_check
      _
    $region15: #{tpu_custom_call.1} parent=1 // pred_check_branch
      %34 = sbr.rel (0) target = $region17
    $region16: #{tpu_custom_call.1} parent=1 // pred_region
      %35 = dma.done [#allocation3], 256
    $region17: #{tpu_custom_call.1} parent=1 // pred_fallthru
      _
    %36 = sfence
    %v37 = vld [vmem:[#allocation6] sm:$0xff]
    %v38 = vld [vmem:[#allocation6 + $0x8] sm:$0xff]
    %v41 = vcombine.high %v37, %v37
    %v42 = vcombine.high %v38, %v38
    %vm45 = vcmask 1043456
    %v46 = vsel %vm45, %v37, -inf
    %v47 = vrot.slane %v46, 4
    %v48 = vmax.f32 %v46, %v47
    %v49 = vrot.slane %v48, 2
    %v50 = vmax.f32 %v48, %v49
    %v51 = vrot.slane %v50, 1
    %v52 = vmax.f32 %v50, %v51
    %v53 = vsel %vm45, %v41, -inf
    %v54 = vrot.slane %v53, 4
    %v55 = vmax.f32 %v53, %v54
    %v56 = vrot.slane %v55, 2
    %v57 = vmax.f32 %v55, %v56
    %v58 = vrot.slane %v57, 1
    %v59 = vmax.f32 %v57, %v58
    %v60 = vsel %vm45, %v38, -inf
    %v61 = vrot.slane %v60, 4
    %v62 = vmax.f32 %v60, %v61
    %v63 = vrot.slane %v62, 2
    %v64 = vmax.f32 %v62, %v63
    %v65 = vrot.slane %v64, 1
    %v66 = vmax.f32 %v64, %v65
    %v67 = vsel %vm45, %v42, -inf
    %v68 = vrot.slane %v67, 4
    %v69 = vmax.f32 %v67, %v68
    %v70 = vrot.slane %v69, 2
    %v71 = vmax.f32 %v69, %v70
    %v72 = vrot.slane %v71, 1
    %v73 = vmax.f32 %v71, %v72
    %v74 = vsel %vm45, %v37, 0.0
    %v75 = vrot.slane %v74, 4
    %v76 = vadd.f32 %v74, %v75
    %v77 = vrot.slane %v76, 2
    %v78 = vadd.f32 %v76, %v77
    %v79 = vrot.slane %v78, 1
    %v80 = vadd.f32 %v78, %v79
    %v81 = vsel %vm45, %v41, 0.0
    %v82 = vrot.slane %v81, 4
    %v83 = vadd.f32 %v81, %v82
    %v84 = vrot.slane %v83, 2
    %v85 = vadd.f32 %v83, %v84
    %v86 = vrot.slane %v85, 1
    %v87 = vadd.f32 %v85, %v86
    %v88 = vsel %vm45, %v38, 0.0
    %v89 = vrot.slane %v88, 4
    %v90 = vadd.f32 %v88, %v89
    %v91 = vrot.slane %v90, 2
    %v92 = vadd.f32 %v90, %v91
    %v93 = vrot.slane %v92, 1
    %v94 = vadd.f32 %v92, %v93
    %v95 = vsel %vm45, %v42, 0.0
    %v96 = vrot.slane %v95, 4
    %v97 = vadd.f32 %v95, %v96
    %v98 = vrot.slane %v97, 2
    %v99 = vadd.f32 %v97, %v98
    %v100 = vrot.slane %v99, 1
    %v101 = vadd.f32 %v99, %v100
    %v102 = vmul.f32 %v80, 0.25
    %v103 = vmul.f32 %v87, 0.25
    %v104 = vmul.f32 %v94, 0.25
    %v105 = vmul.f32 %v101, 0.25
    %vm110 = vcmask 1041409
    %v111 = vsel %vm110, %v104, %v102
    %v112 = vsel %vm110, %v105, %v103
    %113 = vrot.lane.b32.xlu0 %v111, 51
    %v114 = vpop.permute.xlu0 %113
    %115 = vrot.lane.b32.xlu0 %v112, 51
    %v116 = vpop.permute.xlu0 %115
    %vm117 = vcmask 416768
    %v118 = vsel %vm117, %v114, %v116
    %v122 = vsel %vm117, 0.0, %v114
    %v123 = vsel %vm117, %v116, 0.0
    %v128 = vsel %vm110, %v66, %v52
    %v129 = vsel %vm110, %v73, %v59
    %130 = vrot.lane.b32.xlu0 %v128, 51
    %v131 = vpop.permute.xlu0 %130
    %132 = vrot.lane.b32.xlu0 %v129, 51
    %v133 = vpop.permute.xlu0 %132
    %v134 = vsel %vm117, %v131, %v133
    %v138 = vsel %vm117, 0.0, %v131
    %v139 = vsel %vm117, %v133, 0.0
    %v140 = vlaneseq
    %v141 = vand.u32 %v140, 127
    %v142 = vadd.s32 %v141, 128
    %vm143 = vcmp.lt.s32.totalorder %v141, 0
    %v144 = vsub.s32 0, %v141
    %v145 = vsel %vm143, %v144, %v141
    %v146 = vshrl.u32 %v145, 4
    %v147 = vand.u32 %v145, 15
    %v148 = vsub.s32 0, %v147
    %v149 = vsel %vm143, %v148, %v147
    %vm150 = vcmp.lt.s32.totalorder %v142, 0
    %v151 = vsub.s32 0, %v142
    %v152 = vsel %vm150, %v151, %v142
    %v153 = vshrl.u32 %v152, 4
    %v154 = vand.u32 %v152, 15
    %v155 = vsub.s32 0, %v154
    %v156 = vsel %vm150, %v155, %v154
    %vm157 = vcmp.ne.s32.totalorder %v149, 0
    %vm158 = vcmp.ne.s32.totalorder %v156, 0
    %vm159 = vcmp.lt.s32.totalorder %v149, 0
    %vm160 = vcmp.lt.s32.totalorder %v156, 0
    %vm161 = vmand %vm159, %vm157
    %vm162 = vmand %vm160, %vm158
    %v163 = vadd.s32 %v149, 16
    %v164 = vadd.s32 %v156, 16
    %v165 = vsel %vm161, %v163, %v149
    %v166 = vsel %vm162, %v164, %v156
    %v167 = vadd.s32 %v165, 4294967293
    %v168 = vadd.s32 %v166, 4294967293
    %vm169 = vcmp.ge.s32.totalorder %v167, 0
    %vm170 = vcmp.ge.s32.totalorder %v168, 0
    %vm171 = vcmp.lt.s32.totalorder %v167, 16
    %vm172 = vcmp.lt.s32.totalorder %v168, 16
    %vm173 = vmand %vm169, %vm171
    %vm174 = vmand %vm170, %vm172
    %v175 = vadd.s32 %v165, 4294967294
    %v176 = vadd.s32 %v166, 4294967294
    %vm177 = vcmp.ge.s32.totalorder %v175, 0
    %vm178 = vcmp.ge.s32.totalorder %v176, 0
    %vm179 = vcmp.lt.s32.totalorder %v175, 16
    %vm180 = vcmp.lt.s32.totalorder %v176, 16
    %vm181 = vmand %vm177, %vm179
    %vm182 = vmand %vm178, %vm180
    %v183 = vadd.s32 %v165, 4294967295
    %v184 = vadd.s32 %v166, 4294967295
    %vm185 = vcmp.ge.s32.totalorder %v183, 0
    %vm186 = vcmp.ge.s32.totalorder %v184, 0
    %vm187 = vcmp.lt.s32.totalorder %v183, 16
    %vm188 = vcmp.lt.s32.totalorder %v184, 16
    %vm189 = vmand %vm185, %vm187
    %vm190 = vmand %vm186, %vm188
    %vm191 = vcmp.ge.s32.totalorder %v165, 0
    %vm192 = vcmp.ge.s32.totalorder %v166, 0
    %vm193 = vcmp.lt.s32.totalorder %v165, 16
    %vm194 = vcmp.lt.s32.totalorder %v166, 16
    %vm195 = vmand %vm191, %vm193
    %vm196 = vmand %vm192, %vm194
    %v197 = vadd.s32 %v165, 1
    %v198 = vadd.s32 %v166, 1
    %vm199 = vcmp.ge.s32.totalorder %v197, 0
    %vm200 = vcmp.ge.s32.totalorder %v198, 0
    %vm201 = vcmp.lt.s32.totalorder %v197, 16
    %vm202 = vcmp.lt.s32.totalorder %v198, 16
    %vm203 = vmand %vm199, %vm201
    %vm204 = vmand %vm200, %vm202
    %v205 = vadd.s32 %v165, 2
    %v206 = vadd.s32 %v166, 2
    %vm207 = vcmp.ge.s32.totalorder %v205, 0
    %vm208 = vcmp.ge.s32.totalorder %v206, 0
    %vm209 = vcmp.lt.s32.totalorder %v205, 16
    %vm210 = vcmp.lt.s32.totalorder %v206, 16
    %vm211 = vmand %vm207, %vm209
    %vm212 = vmand %vm208, %vm210
    %v213 = vadd.s32 %v165, 3
    %v214 = vadd.s32 %v166, 3
    %vm215 = vcmp.ge.s32.totalorder %v213, 0
    %vm216 = vcmp.ge.s32.totalorder %v214, 0
    %vm217 = vcmp.lt.s32.totalorder %v213, 16
    %vm218 = vcmp.lt.s32.totalorder %v214, 16
    %vm219 = vmand %vm215, %vm217
    %vm220 = vmand %vm216, %vm218
    %s221 = sld [smem:[#allocation2]]
    %v222 = vstv %s221
    %v223 = vmul.f32 %v222, %v122
    %v224 = vmul.f32 %v222, %v118
    %v225 = vadd.f32 %v223, 0.0
    %v226 = vadd.f32 %v224, 0.0
    %s227 = sld [smem:[#allocation2 + $0x7]]
    %v228 = vstv %s227
    %v229 = vmul.f32 %v228, %v122
    %v230 = vmul.f32 %v228, %v118
    %v231 = vmul.f32 %v228, %v123
    %235 = vrot.lane.b32.xlu0 %v229, 112
    %v236 = vpop.permute.xlu0 %235
    %237 = vrot.lane.b32.xlu0 %v230, 112
    %v238 = vpop.permute.xlu0 %237
    %239 = vrot.lane.b32.xlu0 %v231, 112
    %v240 = vpop.permute.xlu0 %239
    %vm241 = vcmask 916480
    %v242 = vsel %vm241, %v236, %v238
    %v243 = vsel %vm241, %v238, %v240
    %v246 = vadd.f32 %v225, %v242
    %v247 = vadd.f32 %v226, %v243
    %s248 = sld [smem:[#allocation2 + $0xe]]
    %v249 = vstv %s248
    %v250 = vmul.f32 %v249, %v122
    %v251 = vmul.f32 %v249, %v118
    %v252 = vmul.f32 %v249, %v123
    %256 = vrot.lane.b32.xlu0 %v250, 96
    %v257 = vpop.permute.xlu0 %256
    %258 = vrot.lane.b32.xlu0 %v251, 96
    %v259 = vpop.permute.xlu0 %258
    %260 = vrot.lane.b32.xlu0 %v252, 96
    %v261 = vpop.permute.xlu0 %260
    %vm262 = vcmask 785408
    %v263 = vsel %vm262, %v257, %v259
    %v264 = vsel %vm262, %v259, %v261
    %v267 = vadd.f32 %v246, %v263
    %v268 = vadd.f32 %v247, %v264
    %s269 = sld [smem:[#allocation2 + $0x15]]
    %v270 = vstv %s269
    %v271 = vmul.f32 %v270, %v122
    %v272 = vmul.f32 %v270, %v118
    %v273 = vmul.f32 %v270, %v123
    %277 = vrot.lane.b32.xlu0 %v271, 80
    %v278 = vpop.permute.xlu0 %277
    %279 = vrot.lane.b32.xlu0 %v272, 80
    %v280 = vpop.permute.xlu0 %279
    %281 = vrot.lane.b32.xlu0 %v273, 80
    %v282 = vpop.permute.xlu0 %281
    %vm283 = vcmask 654336
    %v284 = vsel %vm283, %v278, %v280
    %v285 = vsel %vm283, %v280, %v282
    %v288 = vadd.f32 %v267, %v284
    %v289 = vadd.f32 %v268, %v285
    %s290 = sld [smem:[#allocation2 + $0x1c]]
    %v291 = vstv %s290
    %v292 = vmul.f32 %v291, %v122
    %v293 = vmul.f32 %v291, %v118
    %v294 = vmul.f32 %v291, %v123
    %298 = vrot.lane.b32.xlu0 %v292, 64
    %v299 = vpop.permute.xlu0 %298
    %300 = vrot.lane.b32.xlu0 %v293, 64
    %v301 = vpop.permute.xlu0 %300
    %302 = vrot.lane.b32.xlu0 %v294, 64
    %v303 = vpop.permute.xlu0 %302
    %vm304 = vcmask 523264
    %v305 = vsel %vm304, %v299, %v301
    %v306 = vsel %vm304, %v301, %v303
    %v309 = vadd.f32 %v288, %v305
    %v310 = vadd.f32 %v289, %v306
    %s311 = sld [smem:[#allocation2 + $0x23]]
    %v312 = vstv %s311
    %v313 = vmul.f32 %v312, %v122
    %v314 = vmul.f32 %v312, %v118
    %v315 = vmul.f32 %v312, %v123
    %319 = vrot.lane.b32.xlu0 %v313, 48
    %v320 = vpop.permute.xlu0 %319
    %321 = vrot.lane.b32.xlu0 %v314, 48
    %v322 = vpop.permute.xlu0 %321
    %323 = vrot.lane.b32.xlu0 %v315, 48
    %v324 = vpop.permute.xlu0 %323
    %vm325 = vcmask 392192
    %v326 = vsel %vm325, %v320, %v322
    %v327 = vsel %vm325, %v322, %v324
    %v330 = vadd.f32 %v309, %v326
    %v331 = vadd.f32 %v310, %v327
    %s332 = sld [smem:[#allocation2 + $0x2a]]
    %v333 = vstv %s332
    %v334 = vmul.f32 %v333, %v122
    %v335 = vmul.f32 %v333, %v118
    %v336 = vmul.f32 %v333, %v123
    %340 = vrot.lane.b32.xlu0 %v334, 32
    %v341 = vpop.permute.xlu0 %340
    %342 = vrot.lane.b32.xlu0 %v335, 32
    %v343 = vpop.permute.xlu0 %342
    %344 = vrot.lane.b32.xlu0 %v336, 32
    %v345 = vpop.permute.xlu0 %344
    %vm346 = vcmask 261120
    %v347 = vsel %vm346, %v341, %v343
    %v348 = vsel %vm346, %v343, %v345
    %v351 = vadd.f32 %v330, %v347
    %v352 = vadd.f32 %v331, %v348
    %v353 = vsel %vm173, 1, 0
    %v354 = vsel %vm174, 1, 0
    %vm355 = vcmp.eq.s32.totalorder %v353, 1
    %vm356 = vcmp.eq.s32.totalorder %v354, 1
    %v357 = vsel %vm355, %v351, 0.0
    %v358 = vsel %vm356, %v352, 0.0
    %v359 = vadd.f32 %v357, 0.0
    %v360 = vadd.f32 %v358, 0.0
    %s361 = sld [smem:[#allocation2 + $0x1]]
    %v362 = vstv %s361
    %v363 = vmul.f32 %v362, %v122
    %v364 = vmul.f32 %v362, %v118
    %v365 = vmul.f32 %v362, %v123
    %v366 = vadd.f32 %v363, 0.0
    %v367 = vadd.f32 %v364, 0.0
    %v368 = vadd.f32 %v365, 0.0
    %s369 = sld [smem:[#allocation2 + $0x8]]
    %v370 = vstv %s369
    %v371 = vmul.f32 %v370, %v122
    %v372 = vmul.f32 %v370, %v118
    %v373 = vmul.f32 %v370, %v123
    %377 = vrot.lane.b32.xlu0 %v371, 112
    %v378 = vpop.permute.xlu0 %377
    %379 = vrot.lane.b32.xlu0 %v372, 112
    %v380 = vpop.permute.xlu0 %379
    %381 = vrot.lane.b32.xlu0 %v373, 112
    %v382 = vpop.permute.xlu0 %381
    %v383 = vsel %vm241, %v378, %v380
    %v384 = vsel %vm241, %v380, %v382
    %v388 = vadd.f32 %v366, %v383
    %v389 = vadd.f32 %v367, %v384
    %v390 = vadd.f32 %v368, %v382
    %s391 = sld [smem:[#allocation2 + $0xf]]
    %v392 = vstv %s391
    %v393 = vmul.f32 %v392, %v122
    %v394 = vmul.f32 %v392, %v118
    %v395 = vmul.f32 %v392, %v123
    %399 = vrot.lane.b32.xlu0 %v393, 96
    %v400 = vpop.permute.xlu0 %399
    %401 = vrot.lane.b32.xlu0 %v394, 96
    %v402 = vpop.permute.xlu0 %401
    %403 = vrot.lane.b32.xlu0 %v395, 96
    %v404 = vpop.permute.xlu0 %403
    %v405 = vsel %vm262, %v400, %v402
    %v406 = vsel %vm262, %v402, %v404
    %v410 = vadd.f32 %v388, %v405
    %v411 = vadd.f32 %v389, %v406
    %v412 = vadd.f32 %v390, %v404
    %s413 = sld [smem:[#allocation2 + $0x16]]
    %v414 = vstv %s413
    %v415 = vmul.f32 %v414, %v122
    %v416 = vmul.f32 %v414, %v118
    %v417 = vmul.f32 %v414, %v123
    %421 = vrot.lane.b32.xlu0 %v415, 80
    %v422 = vpop.permute.xlu0 %421
    %423 = vrot.lane.b32.xlu0 %v416, 80
    %v424 = vpop.permute.xlu0 %423
    %425 = vrot.lane.b32.xlu0 %v417, 80
    %v426 = vpop.permute.xlu0 %425
    %v427 = vsel %vm283, %v422, %v424
    %v428 = vsel %vm283, %v424, %v426
    %v432 = vadd.f32 %v410, %v427
    %v433 = vadd.f32 %v411, %v428
    %v434 = vadd.f32 %v412, %v426
    %s435 = sld [smem:[#allocation2 + $0x1d]]
    %v436 = vstv %s435
    %v437 = vmul.f32 %v436, %v122
    %v438 = vmul.f32 %v436, %v118
    %v439 = vmul.f32 %v436, %v123
    %443 = vrot.lane.b32.xlu0 %v437, 64
    %v444 = vpop.permute.xlu0 %443
    %445 = vrot.lane.b32.xlu0 %v438, 64
    %v446 = vpop.permute.xlu0 %445
    %447 = vrot.lane.b32.xlu0 %v439, 64
    %v448 = vpop.permute.xlu0 %447
    %v449 = vsel %vm304, %v444, %v446
    %v450 = vsel %vm304, %v446, %v448
    %v454 = vadd.f32 %v432, %v449
    %v455 = vadd.f32 %v433, %v450
    %v456 = vadd.f32 %v434, %v448
    %s457 = sld [smem:[#allocation2 + $0x24]]
    %v458 = vstv %s457
    %v459 = vmul.f32 %v458, %v122
    %v460 = vmul.f32 %v458, %v118
    %v461 = vmul.f32 %v458, %v123
    %465 = vrot.lane.b32.xlu0 %v459, 48
    %v466 = vpop.permute.xlu0 %465
    %467 = vrot.lane.b32.xlu0 %v460, 48
    %v468 = vpop.permute.xlu0 %467
    %469 = vrot.lane.b32.xlu0 %v461, 48
    %v470 = vpop.permute.xlu0 %469
    %v471 = vsel %vm325, %v466, %v468
    %v472 = vsel %vm325, %v468, %v470
    %v476 = vadd.f32 %v454, %v471
    %v477 = vadd.f32 %v455, %v472
    %v478 = vadd.f32 %v456, %v470
    %s479 = sld [smem:[#allocation2 + $0x2b]]
    %v480 = vstv %s479
    %v481 = vmul.f32 %v480, %v122
    %v482 = vmul.f32 %v480, %v118
    %v483 = vmul.f32 %v480, %v123
    %487 = vrot.lane.b32.xlu0 %v481, 32
    %v488 = vpop.permute.xlu0 %487
    %489 = vrot.lane.b32.xlu0 %v482, 32
    %v490 = vpop.permute.xlu0 %489
    %491 = vrot.lane.b32.xlu0 %v483, 32
    %v492 = vpop.permute.xlu0 %491
    %v493 = vsel %vm346, %v488, %v490
    %v494 = vsel %vm346, %v490, %v492
    %v498 = vadd.f32 %v476, %v493
    %v499 = vadd.f32 %v477, %v494
    %v500 = vadd.f32 %v478, %v492
    %v501 = vsel %vm181, 1, 0
    %v502 = vsel %vm182, 1, 0
    %vm503 = vcmp.eq.s32.totalorder %v501, 1
    %vm504 = vcmp.eq.s32.totalorder %v502, 1
    %508 = vrot.lane.b32.xlu0 %v498, 127
    %v509 = vpop.permute.xlu0 %508
    %510 = vrot.lane.b32.xlu0 %v499, 127
    %v511 = vpop.permute.xlu0 %510
    %512 = vrot.lane.b32.xlu0 %v500, 127
    %v513 = vpop.permute.xlu0 %512
    %vm514 = vcmask 1039360
    %v515 = vsel %vm514, %v509, %v511
    %v516 = vsel %vm514, %v511, %v513
    %v519 = vsel %vm503, %v515, 0.0
    %v520 = vsel %vm504, %v516, 0.0
    %v521 = vadd.f32 %v359, %v519
    %v522 = vadd.f32 %v360, %v520
    %s523 = sld [smem:[#allocation2 + $0x2]]
    %v524 = vstv %s523
    %v525 = vmul.f32 %v524, %v122
    %v526 = vmul.f32 %v524, %v118
    %v527 = vmul.f32 %v524, %v123
    %v528 = vadd.f32 %v525, 0.0
    %v529 = vadd.f32 %v526, 0.0
    %v530 = vadd.f32 %v527, 0.0
    %s531 = sld [smem:[#allocation2 + $0x9]]
    %v532 = vstv %s531
    %v533 = vmul.f32 %v532, %v122
    %v534 = vmul.f32 %v532, %v118
    %v535 = vmul.f32 %v532, %v123
    %539 = vrot.lane.b32.xlu0 %v533, 112
    %v540 = vpop.permute.xlu0 %539
    %541 = vrot.lane.b32.xlu0 %v534, 112
    %v542 = vpop.permute.xlu0 %541
    %543 = vrot.lane.b32.xlu0 %v535, 112
    %v544 = vpop.permute.xlu0 %543
    %v545 = vsel %vm241, %v540, %v542
    %v546 = vsel %vm241, %v542, %v544
    %v550 = vadd.f32 %v528, %v545
    %v551 = vadd.f32 %v529, %v546
    %v552 = vadd.f32 %v530, %v544
    %s553 = sld [smem:[#allocation2 + $0x10]]
    %v554 = vstv %s553
    %v555 = vmul.f32 %v554, %v122
    %v556 = vmul.f32 %v554, %v118
    %v557 = vmul.f32 %v554, %v123
    %561 = vrot.lane.b32.xlu0 %v555, 96
    %v562 = vpop.permute.xlu0 %561
    %563 = vrot.lane.b32.xlu0 %v556, 96
    %v564 = vpop.permute.xlu0 %563
    %565 = vrot.lane.b32.xlu0 %v557, 96
    %v566 = vpop.permute.xlu0 %565
    %v567 = vsel %vm262, %v562, %v564
    %v568 = vsel %vm262, %v564, %v566
    %v572 = vadd.f32 %v550, %v567
    %v573 = vadd.f32 %v551, %v568
    %v574 = vadd.f32 %v552, %v566
    %s575 = sld [smem:[#allocation2 + $0x17]]
    %v576 = vstv %s575
    %v577 = vmul.f32 %v576, %v122
    %v578 = vmul.f32 %v576, %v118
    %v579 = vmul.f32 %v576, %v123
    %583 = vrot.lane.b32.xlu0 %v577, 80
    %v584 = vpop.permute.xlu0 %583
    %585 = vrot.lane.b32.xlu0 %v578, 80
    %v586 = vpop.permute.xlu0 %585
    %587 = vrot.lane.b32.xlu0 %v579, 80
    %v588 = vpop.permute.xlu0 %587
    %v589 = vsel %vm283, %v584, %v586
    %v590 = vsel %vm283, %v586, %v588
    %v594 = vadd.f32 %v572, %v589
    %v595 = vadd.f32 %v573, %v590
    %v596 = vadd.f32 %v574, %v588
    %s597 = sld [smem:[#allocation2 + $0x1e]]
    %v598 = vstv %s597
    %v599 = vmul.f32 %v598, %v122
    %v600 = vmul.f32 %v598, %v118
    %v601 = vmul.f32 %v598, %v123
    %605 = vrot.lane.b32.xlu0 %v599, 64
    %v606 = vpop.permute.xlu0 %605
    %607 = vrot.lane.b32.xlu0 %v600, 64
    %v608 = vpop.permute.xlu0 %607
    %609 = vrot.lane.b32.xlu0 %v601, 64
    %v610 = vpop.permute.xlu0 %609
    %v611 = vsel %vm304, %v606, %v608
    %v612 = vsel %vm304, %v608, %v610
    %v616 = vadd.f32 %v594, %v611
    %v617 = vadd.f32 %v595, %v612
    %v618 = vadd.f32 %v596, %v610
    %s619 = sld [smem:[#allocation2 + $0x25]]
    %v620 = vstv %s619
    %v621 = vmul.f32 %v620, %v122
    %v622 = vmul.f32 %v620, %v118
    %v623 = vmul.f32 %v620, %v123
    %627 = vrot.lane.b32.xlu0 %v621, 48
    %v628 = vpop.permute.xlu0 %627
    %629 = vrot.lane.b32.xlu0 %v622, 48
    %v630 = vpop.permute.xlu0 %629
    %631 = vrot.lane.b32.xlu0 %v623, 48
    %v632 = vpop.permute.xlu0 %631
    %v633 = vsel %vm325, %v628, %v630
    %v634 = vsel %vm325, %v630, %v632
    %v638 = vadd.f32 %v616, %v633
    %v639 = vadd.f32 %v617, %v634
    %v640 = vadd.f32 %v618, %v632
    %s641 = sld [smem:[#allocation2 + $0x2c]]
    %v642 = vstv %s641
    %v643 = vmul.f32 %v642, %v122
    %v644 = vmul.f32 %v642, %v118
    %v645 = vmul.f32 %v642, %v123
    %649 = vrot.lane.b32.xlu0 %v643, 32
    %v650 = vpop.permute.xlu0 %649
    %651 = vrot.lane.b32.xlu0 %v644, 32
    %v652 = vpop.permute.xlu0 %651
    %653 = vrot.lane.b32.xlu0 %v645, 32
    %v654 = vpop.permute.xlu0 %653
    %v655 = vsel %vm346, %v650, %v652
    %v656 = vsel %vm346, %v652, %v654
    %v660 = vadd.f32 %v638, %v655
    %v661 = vadd.f32 %v639, %v656
    %v662 = vadd.f32 %v640, %v654
    %v663 = vsel %vm189, 1, 0
    %v664 = vsel %vm190, 1, 0
    %vm665 = vcmp.eq.s32.totalorder %v663, 1
    %vm666 = vcmp.eq.s32.totalorder %v664, 1
    %670 = vrot.lane.b32.xlu0 %v660, 126
    %v671 = vpop.permute.xlu0 %670
    %672 = vrot.lane.b32.xlu0 %v661, 126
    %v673 = vpop.permute.xlu0 %672
    %674 = vrot.lane.b32.xlu0 %v662, 126
    %v675 = vpop.permute.xlu0 %674
    %vm676 = vcmask 1031168
    %v677 = vsel %vm676, %v671, %v673
    %v678 = vsel %vm676, %v673, %v675
    %v681 = vsel %vm665, %v677, 0.0
    %v682 = vsel %vm666, %v678, 0.0
    %v683 = vadd.f32 %v521, %v681
    %v684 = vadd.f32 %v522, %v682
    %s685 = sld [smem:[#allocation2 + $0x3]]
    %v686 = vstv %s685
    %v687 = vmul.f32 %v686, %v122
    %v688 = vmul.f32 %v686, %v118
    %v689 = vmul.f32 %v686, %v123
    %v690 = vadd.f32 %v687, 0.0
    %v691 = vadd.f32 %v688, 0.0
    %v692 = vadd.f32 %v689, 0.0
    %s693 = sld [smem:[#allocation2 + $0xa]]
    %v694 = vstv %s693
    %v695 = vmul.f32 %v694, %v122
    %v696 = vmul.f32 %v694, %v118
    %v697 = vmul.f32 %v694, %v123
    %701 = vrot.lane.b32.xlu0 %v695, 112
    %v702 = vpop.permute.xlu0 %701
    %703 = vrot.lane.b32.xlu0 %v696, 112
    %v704 = vpop.permute.xlu0 %703
    %705 = vrot.lane.b32.xlu0 %v697, 112
    %v706 = vpop.permute.xlu0 %705
    %v707 = vsel %vm241, %v702, %v704
    %v708 = vsel %vm241, %v704, %v706
    %v712 = vadd.f32 %v690, %v707
    %v713 = vadd.f32 %v691, %v708
    %v714 = vadd.f32 %v692, %v706
    %s715 = sld [smem:[#allocation2 + $0x11]]
    %v716 = vstv %s715
    %v717 = vmul.f32 %v716, %v122
    %v718 = vmul.f32 %v716, %v118
    %v719 = vmul.f32 %v716, %v123
    %723 = vrot.lane.b32.xlu0 %v717, 96
    %v724 = vpop.permute.xlu0 %723
    %725 = vrot.lane.b32.xlu0 %v718, 96
    %v726 = vpop.permute.xlu0 %725
    %727 = vrot.lane.b32.xlu0 %v719, 96
    %v728 = vpop.permute.xlu0 %727
    %v729 = vsel %vm262, %v724, %v726
    %v730 = vsel %vm262, %v726, %v728
    %v734 = vadd.f32 %v712, %v729
    %v735 = vadd.f32 %v713, %v730
    %v736 = vadd.f32 %v714, %v728
    %s737 = sld [smem:[#allocation2 + $0x18]]
    %v738 = vstv %s737
    %v739 = vmul.f32 %v738, %v122
    %v740 = vmul.f32 %v738, %v118
    %v741 = vmul.f32 %v738, %v123
    %745 = vrot.lane.b32.xlu0 %v739, 80
    %v746 = vpop.permute.xlu0 %745
    %747 = vrot.lane.b32.xlu0 %v740, 80
    %v748 = vpop.permute.xlu0 %747
    %749 = vrot.lane.b32.xlu0 %v741, 80
    %v750 = vpop.permute.xlu0 %749
    %v751 = vsel %vm283, %v746, %v748
    %v752 = vsel %vm283, %v748, %v750
    %v756 = vadd.f32 %v734, %v751
    %v757 = vadd.f32 %v735, %v752
    %v758 = vadd.f32 %v736, %v750
    %s759 = sld [smem:[#allocation2 + $0x1f]]
    %v760 = vstv %s759
    %v761 = vmul.f32 %v760, %v122
    %v762 = vmul.f32 %v760, %v118
    %v763 = vmul.f32 %v760, %v123
    %767 = vrot.lane.b32.xlu0 %v761, 64
    %v768 = vpop.permute.xlu0 %767
    %769 = vrot.lane.b32.xlu0 %v762, 64
    %v770 = vpop.permute.xlu0 %769
    %771 = vrot.lane.b32.xlu0 %v763, 64
    %v772 = vpop.permute.xlu0 %771
    %v773 = vsel %vm304, %v768, %v770
    %v774 = vsel %vm304, %v770, %v772
    %v778 = vadd.f32 %v756, %v773
    %v779 = vadd.f32 %v757, %v774
    %v780 = vadd.f32 %v758, %v772
    %s781 = sld [smem:[#allocation2 + $0x26]]
    %v782 = vstv %s781
    %v783 = vmul.f32 %v782, %v122
    %v784 = vmul.f32 %v782, %v118
    %v785 = vmul.f32 %v782, %v123
    %789 = vrot.lane.b32.xlu0 %v783, 48
    %v790 = vpop.permute.xlu0 %789
    %791 = vrot.lane.b32.xlu0 %v784, 48
    %v792 = vpop.permute.xlu0 %791
    %793 = vrot.lane.b32.xlu0 %v785, 48
    %v794 = vpop.permute.xlu0 %793
    %v795 = vsel %vm325, %v790, %v792
    %v796 = vsel %vm325, %v792, %v794
    %v800 = vadd.f32 %v778, %v795
    %v801 = vadd.f32 %v779, %v796
    %v802 = vadd.f32 %v780, %v794
    %s803 = sld [smem:[#allocation2 + $0x2d]]
    %v804 = vstv %s803
    %v805 = vmul.f32 %v804, %v122
    %v806 = vmul.f32 %v804, %v118
    %v807 = vmul.f32 %v804, %v123
    %811 = vrot.lane.b32.xlu0 %v805, 32
    %v812 = vpop.permute.xlu0 %811
    %813 = vrot.lane.b32.xlu0 %v806, 32
    %v814 = vpop.permute.xlu0 %813
    %815 = vrot.lane.b32.xlu0 %v807, 32
    %v816 = vpop.permute.xlu0 %815
    %v817 = vsel %vm346, %v812, %v814
    %v818 = vsel %vm346, %v814, %v816
    %v822 = vadd.f32 %v800, %v817
    %v823 = vadd.f32 %v801, %v818
    %v824 = vadd.f32 %v802, %v816
    %v825 = vsel %vm195, 1, 0
    %v826 = vsel %vm196, 1, 0
    %vm827 = vcmp.eq.s32.totalorder %v825, 1
    %vm828 = vcmp.eq.s32.totalorder %v826, 1
    %832 = vrot.lane.b32.xlu0 %v822, 125
    %v833 = vpop.permute.xlu0 %832
    %834 = vrot.lane.b32.xlu0 %v823, 125
    %v835 = vpop.permute.xlu0 %834
    %836 = vrot.lane.b32.xlu0 %v824, 125
    %v837 = vpop.permute.xlu0 %836
    %vm838 = vcmask 1022976
    %v839 = vsel %vm838, %v833, %v835
    %v840 = vsel %vm838, %v835, %v837
    %v843 = vsel %vm827, %v839, 0.0
    %v844 = vsel %vm828, %v840, 0.0
    %v845 = vadd.f32 %v683, %v843
    %v846 = vadd.f32 %v684, %v844
    %s847 = sld [smem:[#allocation2 + $0x4]]
    %v848 = vstv %s847
    %v849 = vmul.f32 %v848, %v122
    %v850 = vmul.f32 %v848, %v118
    %v851 = vmul.f32 %v848, %v123
    %v852 = vadd.f32 %v849, 0.0
    %v853 = vadd.f32 %v850, 0.0
    %v854 = vadd.f32 %v851, 0.0
    %s855 = sld [smem:[#allocation2 + $0xb]]
    %v856 = vstv %s855
    %v857 = vmul.f32 %v856, %v122
    %v858 = vmul.f32 %v856, %v118
    %v859 = vmul.f32 %v856, %v123
    %863 = vrot.lane.b32.xlu0 %v857, 112
    %v864 = vpop.permute.xlu0 %863
    %865 = vrot.lane.b32.xlu0 %v858, 112
    %v866 = vpop.permute.xlu0 %865
    %867 = vrot.lane.b32.xlu0 %v859, 112
    %v868 = vpop.permute.xlu0 %867
    %v869 = vsel %vm241, %v864, %v866
    %v870 = vsel %vm241, %v866, %v868
    %v874 = vadd.f32 %v852, %v869
    %v875 = vadd.f32 %v853, %v870
    %v876 = vadd.f32 %v854, %v868
    %s877 = sld [smem:[#allocation2 + $0x12]]
    %v878 = vstv %s877
    %v879 = vmul.f32 %v878, %v122
    %v880 = vmul.f32 %v878, %v118
    %v881 = vmul.f32 %v878, %v123
    %885 = vrot.lane.b32.xlu0 %v879, 96
    %v886 = vpop.permute.xlu0 %885
    %887 = vrot.lane.b32.xlu0 %v880, 96
    %v888 = vpop.permute.xlu0 %887
    %889 = vrot.lane.b32.xlu0 %v881, 96
    %v890 = vpop.permute.xlu0 %889
    %v891 = vsel %vm262, %v886, %v888
    %v892 = vsel %vm262, %v888, %v890
    %v896 = vadd.f32 %v874, %v891
    %v897 = vadd.f32 %v875, %v892
    %v898 = vadd.f32 %v876, %v890
    %s899 = sld [smem:[#allocation2 + $0x19]]
    %v900 = vstv %s899
    %v901 = vmul.f32 %v900, %v122
    %v902 = vmul.f32 %v900, %v118
    %v903 = vmul.f32 %v900, %v123
    %907 = vrot.lane.b32.xlu0 %v901, 80
    %v908 = vpop.permute.xlu0 %907
    %909 = vrot.lane.b32.xlu0 %v902, 80
    %v910 = vpop.permute.xlu0 %909
    %911 = vrot.lane.b32.xlu0 %v903, 80
    %v912 = vpop.permute.xlu0 %911
    %v913 = vsel %vm283, %v908, %v910
    %v914 = vsel %vm283, %v910, %v912
    %v918 = vadd.f32 %v896, %v913
    %v919 = vadd.f32 %v897, %v914
    %v920 = vadd.f32 %v898, %v912
    %s921 = sld [smem:[#allocation2 + $0x20]]
    %v922 = vstv %s921
    %v923 = vmul.f32 %v922, %v122
    %v924 = vmul.f32 %v922, %v118
    %v925 = vmul.f32 %v922, %v123
    %929 = vrot.lane.b32.xlu0 %v923, 64
    %v930 = vpop.permute.xlu0 %929
    %931 = vrot.lane.b32.xlu0 %v924, 64
    %v932 = vpop.permute.xlu0 %931
    %933 = vrot.lane.b32.xlu0 %v925, 64
    %v934 = vpop.permute.xlu0 %933
    %v935 = vsel %vm304, %v930, %v932
    %v936 = vsel %vm304, %v932, %v934
    %v940 = vadd.f32 %v918, %v935
    %v941 = vadd.f32 %v919, %v936
    %v942 = vadd.f32 %v920, %v934
    %s943 = sld [smem:[#allocation2 + $0x27]]
    %v944 = vstv %s943
    %v945 = vmul.f32 %v944, %v122
    %v946 = vmul.f32 %v944, %v118
    %v947 = vmul.f32 %v944, %v123
    %951 = vrot.lane.b32.xlu0 %v945, 48
    %v952 = vpop.permute.xlu0 %951
    %953 = vrot.lane.b32.xlu0 %v946, 48
    %v954 = vpop.permute.xlu0 %953
    %955 = vrot.lane.b32.xlu0 %v947, 48
    %v956 = vpop.permute.xlu0 %955
    %v957 = vsel %vm325, %v952, %v954
    %v958 = vsel %vm325, %v954, %v956
    %v962 = vadd.f32 %v940, %v957
    %v963 = vadd.f32 %v941, %v958
    %v964 = vadd.f32 %v942, %v956
    %s965 = sld [smem:[#allocation2 + $0x2e]]
    %v966 = vstv %s965
    %v967 = vmul.f32 %v966, %v122
    %v968 = vmul.f32 %v966, %v118
    %v969 = vmul.f32 %v966, %v123
    %973 = vrot.lane.b32.xlu0 %v967, 32
    %v974 = vpop.permute.xlu0 %973
    %975 = vrot.lane.b32.xlu0 %v968, 32
    %v976 = vpop.permute.xlu0 %975
    %977 = vrot.lane.b32.xlu0 %v969, 32
    %v978 = vpop.permute.xlu0 %977
    %v979 = vsel %vm346, %v974, %v976
    %v980 = vsel %vm346, %v976, %v978
    %v984 = vadd.f32 %v962, %v979
    %v985 = vadd.f32 %v963, %v980
    %v986 = vadd.f32 %v964, %v978
    %v987 = vsel %vm203, 1, 0
    %v988 = vsel %vm204, 1, 0
    %vm989 = vcmp.eq.s32.totalorder %v987, 1
    %vm990 = vcmp.eq.s32.totalorder %v988, 1
    %994 = vrot.lane.b32.xlu0 %v984, 124
    %v995 = vpop.permute.xlu0 %994
    %996 = vrot.lane.b32.xlu0 %v985, 124
    %v997 = vpop.permute.xlu0 %996
    %998 = vrot.lane.b32.xlu0 %v986, 124
    %v999 = vpop.permute.xlu0 %998
    %vm1000 = vcmask 1014784
    %v1001 = vsel %vm1000, %v995, %v997
    %v1002 = vsel %vm1000, %v997, %v999
    %v1005 = vsel %vm989, %v1001, 0.0
    %v1006 = vsel %vm990, %v1002, 0.0
    %v1007 = vadd.f32 %v845, %v1005
    %v1008 = vadd.f32 %v846, %v1006
    %s1009 = sld [smem:[#allocation2 + $0x5]]
    %v1010 = vstv %s1009
    %v1011 = vmul.f32 %v1010, %v122
    %v1012 = vmul.f32 %v1010, %v118
    %v1013 = vmul.f32 %v1010, %v123
    %v1014 = vadd.f32 %v1011, 0.0
    %v1015 = vadd.f32 %v1012, 0.0
    %v1016 = vadd.f32 %v1013, 0.0
    %s1017 = sld [smem:[#allocation2 + $0xc]]
    %v1018 = vstv %s1017
    %v1019 = vmul.f32 %v1018, %v122
    %v1020 = vmul.f32 %v1018, %v118
    %v1021 = vmul.f32 %v1018, %v123
    %1025 = vrot.lane.b32.xlu0 %v1019, 112
    %v1026 = vpop.permute.xlu0 %1025
    %1027 = vrot.lane.b32.xlu0 %v1020, 112
    %v1028 = vpop.permute.xlu0 %1027
    %1029 = vrot.lane.b32.xlu0 %v1021, 112
    %v1030 = vpop.permute.xlu0 %1029
    %v1031 = vsel %vm241, %v1026, %v1028
    %v1032 = vsel %vm241, %v1028, %v1030
    %v1036 = vadd.f32 %v1014, %v1031
    %v1037 = vadd.f32 %v1015, %v1032
    %v1038 = vadd.f32 %v1016, %v1030
    %s1039 = sld [smem:[#allocation2 + $0x13]]
    %v1040 = vstv %s1039
    %v1041 = vmul.f32 %v1040, %v122
    %v1042 = vmul.f32 %v1040, %v118
    %v1043 = vmul.f32 %v1040, %v123
    %1047 = vrot.lane.b32.xlu0 %v1041, 96
    %v1048 = vpop.permute.xlu0 %1047
    %1049 = vrot.lane.b32.xlu0 %v1042, 96
    %v1050 = vpop.permute.xlu0 %1049
    %1051 = vrot.lane.b32.xlu0 %v1043, 96
    %v1052 = vpop.permute.xlu0 %1051
    %v1053 = vsel %vm262, %v1048, %v1050
    %v1054 = vsel %vm262, %v1050, %v1052
    %v1058 = vadd.f32 %v1036, %v1053
    %v1059 = vadd.f32 %v1037, %v1054
    %v1060 = vadd.f32 %v1038, %v1052
    %s1061 = sld [smem:[#allocation2 + $0x1a]]
    %v1062 = vstv %s1061
    %v1063 = vmul.f32 %v1062, %v122
    %v1064 = vmul.f32 %v1062, %v118
    %v1065 = vmul.f32 %v1062, %v123
    %1069 = vrot.lane.b32.xlu0 %v1063, 80
    %v1070 = vpop.permute.xlu0 %1069
    %1071 = vrot.lane.b32.xlu0 %v1064, 80
    %v1072 = vpop.permute.xlu0 %1071
    %1073 = vrot.lane.b32.xlu0 %v1065, 80
    %v1074 = vpop.permute.xlu0 %1073
    %v1075 = vsel %vm283, %v1070, %v1072
    %v1076 = vsel %vm283, %v1072, %v1074
    %v1080 = vadd.f32 %v1058, %v1075
    %v1081 = vadd.f32 %v1059, %v1076
    %v1082 = vadd.f32 %v1060, %v1074
    %s1083 = sld [smem:[#allocation2 + $0x21]]
    %v1084 = vstv %s1083
    %v1085 = vmul.f32 %v1084, %v122
    %v1086 = vmul.f32 %v1084, %v118
    %v1087 = vmul.f32 %v1084, %v123
    %1091 = vrot.lane.b32.xlu0 %v1085, 64
    %v1092 = vpop.permute.xlu0 %1091
    %1093 = vrot.lane.b32.xlu0 %v1086, 64
    %v1094 = vpop.permute.xlu0 %1093
    %1095 = vrot.lane.b32.xlu0 %v1087, 64
    %v1096 = vpop.permute.xlu0 %1095
    %v1097 = vsel %vm304, %v1092, %v1094
    %v1098 = vsel %vm304, %v1094, %v1096
    %v1102 = vadd.f32 %v1080, %v1097
    %v1103 = vadd.f32 %v1081, %v1098
    %v1104 = vadd.f32 %v1082, %v1096
    %s1105 = sld [smem:[#allocation2 + $0x28]]
    %v1106 = vstv %s1105
    %v1107 = vmul.f32 %v1106, %v122
    %v1108 = vmul.f32 %v1106, %v118
    %v1109 = vmul.f32 %v1106, %v123
    %1113 = vrot.lane.b32.xlu0 %v1107, 48
    %v1114 = vpop.permute.xlu0 %1113
    %1115 = vrot.lane.b32.xlu0 %v1108, 48
    %v1116 = vpop.permute.xlu0 %1115
    %1117 = vrot.lane.b32.xlu0 %v1109, 48
    %v1118 = vpop.permute.xlu0 %1117
    %v1119 = vsel %vm325, %v1114, %v1116
    %v1120 = vsel %vm325, %v1116, %v1118
    %v1124 = vadd.f32 %v1102, %v1119
    %v1125 = vadd.f32 %v1103, %v1120
    %v1126 = vadd.f32 %v1104, %v1118
    %s1127 = sld [smem:[#allocation2 + $0x2f]]
    %v1128 = vstv %s1127
    %v1129 = vmul.f32 %v1128, %v122
    %v1130 = vmul.f32 %v1128, %v118
    %v1131 = vmul.f32 %v1128, %v123
    %1135 = vrot.lane.b32.xlu0 %v1129, 32
    %v1136 = vpop.permute.xlu0 %1135
    %1137 = vrot.lane.b32.xlu0 %v1130, 32
    %v1138 = vpop.permute.xlu0 %1137
    %1139 = vrot.lane.b32.xlu0 %v1131, 32
    %v1140 = vpop.permute.xlu0 %1139
    %v1141 = vsel %vm346, %v1136, %v1138
    %v1142 = vsel %vm346, %v1138, %v1140
    %v1146 = vadd.f32 %v1124, %v1141
    %v1147 = vadd.f32 %v1125, %v1142
    %v1148 = vadd.f32 %v1126, %v1140
    %v1149 = vsel %vm211, 1, 0
    %v1150 = vsel %vm212, 1, 0
    %vm1151 = vcmp.eq.s32.totalorder %v1149, 1
    %vm1152 = vcmp.eq.s32.totalorder %v1150, 1
    %1156 = vrot.lane.b32.xlu0 %v1146, 123
    %v1157 = vpop.permute.xlu0 %1156
    %1158 = vrot.lane.b32.xlu0 %v1147, 123
    %v1159 = vpop.permute.xlu0 %1158
    %1160 = vrot.lane.b32.xlu0 %v1148, 123
    %v1161 = vpop.permute.xlu0 %1160
    %vm1162 = vcmask 1006592
    %v1163 = vsel %vm1162, %v1157, %v1159
    %v1164 = vsel %vm1162, %v1159, %v1161
    %v1167 = vsel %vm1151, %v1163, 0.0
    %v1168 = vsel %vm1152, %v1164, 0.0
    %v1169 = vadd.f32 %v1007, %v1167
    %v1170 = vadd.f32 %v1008, %v1168
    %s1171 = sld [smem:[#allocation2 + $0x6]]
    %v1172 = vstv %s1171
    %v1173 = vmul.f32 %v1172, %v122
    %v1174 = vmul.f32 %v1172, %v118
    %v1175 = vmul.f32 %v1172, %v123
    %v1176 = vadd.f32 %v1173, 0.0
    %v1177 = vadd.f32 %v1174, 0.0
    %v1178 = vadd.f32 %v1175, 0.0
    %s1179 = sld [smem:[#allocation2 + $0xd]]
    %v1180 = vstv %s1179
    %v1181 = vmul.f32 %v1180, %v122
    %v1182 = vmul.f32 %v1180, %v118
    %v1183 = vmul.f32 %v1180, %v123
    %1187 = vrot.lane.b32.xlu0 %v1181, 112
    %v1188 = vpop.permute.xlu0 %1187
    %1189 = vrot.lane.b32.xlu0 %v1182, 112
    %v1190 = vpop.permute.xlu0 %1189
    %1191 = vrot.lane.b32.xlu0 %v1183, 112
    %v1192 = vpop.permute.xlu0 %1191
    %v1193 = vsel %vm241, %v1188, %v1190
    %v1194 = vsel %vm241, %v1190, %v1192
    %v1198 = vadd.f32 %v1176, %v1193
    %v1199 = vadd.f32 %v1177, %v1194
    %v1200 = vadd.f32 %v1178, %v1192
    %s1201 = sld [smem:[#allocation2 + $0x14]]
    %v1202 = vstv %s1201
    %v1203 = vmul.f32 %v1202, %v122
    %v1204 = vmul.f32 %v1202, %v118
    %v1205 = vmul.f32 %v1202, %v123
    %1209 = vrot.lane.b32.xlu0 %v1203, 96
    %v1210 = vpop.permute.xlu0 %1209
    %1211 = vrot.lane.b32.xlu0 %v1204, 96
    %v1212 = vpop.permute.xlu0 %1211
    %1213 = vrot.lane.b32.xlu0 %v1205, 96
    %v1214 = vpop.permute.xlu0 %1213
    %v1215 = vsel %vm262, %v1210, %v1212
    %v1216 = vsel %vm262, %v1212, %v1214
    %v1220 = vadd.f32 %v1198, %v1215
    %v1221 = vadd.f32 %v1199, %v1216
    %v1222 = vadd.f32 %v1200, %v1214
    %s1223 = sld [smem:[#allocation2 + $0x1b]]
    %v1224 = vstv %s1223
    %v1225 = vmul.f32 %v1224, %v122
    %v1226 = vmul.f32 %v1224, %v118
    %v1227 = vmul.f32 %v1224, %v123
    %1231 = vrot.lane.b32.xlu0 %v1225, 80
    %v1232 = vpop.permute.xlu0 %1231
    %1233 = vrot.lane.b32.xlu0 %v1226, 80
    %v1234 = vpop.permute.xlu0 %1233
    %1235 = vrot.lane.b32.xlu0 %v1227, 80
    %v1236 = vpop.permute.xlu0 %1235
    %v1237 = vsel %vm283, %v1232, %v1234
    %v1238 = vsel %vm283, %v1234, %v1236
    %v1242 = vadd.f32 %v1220, %v1237
    %v1243 = vadd.f32 %v1221, %v1238
    %v1244 = vadd.f32 %v1222, %v1236
    %s1245 = sld [smem:[#allocation2 + $0x22]]
    %v1246 = vstv %s1245
    %v1247 = vmul.f32 %v1246, %v122
    %v1248 = vmul.f32 %v1246, %v118
    %v1249 = vmul.f32 %v1246, %v123
    %1253 = vrot.lane.b32.xlu0 %v1247, 64
    %v1254 = vpop.permute.xlu0 %1253
    %1255 = vrot.lane.b32.xlu0 %v1248, 64
    %v1256 = vpop.permute.xlu0 %1255
    %1257 = vrot.lane.b32.xlu0 %v1249, 64
    %v1258 = vpop.permute.xlu0 %1257
    %v1259 = vsel %vm304, %v1254, %v1256
    %v1260 = vsel %vm304, %v1256, %v1258
    %v1264 = vadd.f32 %v1242, %v1259
    %v1265 = vadd.f32 %v1243, %v1260
    %v1266 = vadd.f32 %v1244, %v1258
    %s1267 = sld [smem:[#allocation2 + $0x29]]
    %v1268 = vstv %s1267
    %v1269 = vmul.f32 %v1268, %v122
    %v1270 = vmul.f32 %v1268, %v118
    %v1271 = vmul.f32 %v1268, %v123
    %1275 = vrot.lane.b32.xlu0 %v1269, 48
    %v1276 = vpop.permute.xlu0 %1275
    %1277 = vrot.lane.b32.xlu0 %v1270, 48
    %v1278 = vpop.permute.xlu0 %1277
    %1279 = vrot.lane.b32.xlu0 %v1271, 48
    %v1280 = vpop.permute.xlu0 %1279
    %v1281 = vsel %vm325, %v1276, %v1278
    %v1282 = vsel %vm325, %v1278, %v1280
    %v1286 = vadd.f32 %v1264, %v1281
    %v1287 = vadd.f32 %v1265, %v1282
    %v1288 = vadd.f32 %v1266, %v1280
    %s1289 = sld [smem:[#allocation2 + $0x30]]
    %v1290 = vstv %s1289
    %v1291 = vmul.f32 %v1290, %v122
    %v1292 = vmul.f32 %v1290, %v118
    %v1293 = vmul.f32 %v1290, %v123
    %1297 = vrot.lane.b32.xlu0 %v1291, 32
    %v1298 = vpop.permute.xlu0 %1297
    %1299 = vrot.lane.b32.xlu0 %v1292, 32
    %v1300 = vpop.permute.xlu0 %1299
    %1301 = vrot.lane.b32.xlu0 %v1293, 32
    %v1302 = vpop.permute.xlu0 %1301
    %v1303 = vsel %vm346, %v1298, %v1300
    %v1304 = vsel %vm346, %v1300, %v1302
    %v1308 = vadd.f32 %v1286, %v1303
    %v1309 = vadd.f32 %v1287, %v1304
    %v1310 = vadd.f32 %v1288, %v1302
    %v1311 = vsel %vm219, 1, 0
    %v1312 = vsel %vm220, 1, 0
    %vm1313 = vcmp.eq.s32.totalorder %v1311, 1
    %vm1314 = vcmp.eq.s32.totalorder %v1312, 1
    %1318 = vrot.lane.b32.xlu0 %v1308, 122
    %v1319 = vpop.permute.xlu0 %1318
    %1320 = vrot.lane.b32.xlu0 %v1309, 122
    %v1321 = vpop.permute.xlu0 %1320
    %1322 = vrot.lane.b32.xlu0 %v1310, 122
    %v1323 = vpop.permute.xlu0 %1322
    %vm1324 = vcmask 998400
    %v1325 = vsel %vm1324, %v1319, %v1321
    %v1326 = vsel %vm1324, %v1321, %v1323
    %v1329 = vsel %vm1313, %v1325, 0.0
    %v1330 = vsel %vm1314, %v1326, 0.0
    %v1331 = vadd.f32 %v1169, %v1329
    %v1332 = vadd.f32 %v1170, %v1330
    %s1333 = sld [smem:[#allocation2 + $0x31]]
    %v1334 = vstv %s1333
    %v1335 = vmul.f32 %v1334, %v138
    %v1336 = vmul.f32 %v1334, %v134
    %v1337 = vadd.f32 %v1335, 0.0
    %v1338 = vadd.f32 %v1336, 0.0
    %s1339 = sld [smem:[#allocation2 + $0x38]]
    %v1340 = vstv %s1339
    %v1341 = vmul.f32 %v1340, %v138
    %v1342 = vmul.f32 %v1340, %v134
    %v1343 = vmul.f32 %v1340, %v139
    %1347 = vrot.lane.b32.xlu0 %v1341, 112
    %v1348 = vpop.permute.xlu0 %1347
    %1349 = vrot.lane.b32.xlu0 %v1342, 112
    %v1350 = vpop.permute.xlu0 %1349
    %1351 = vrot.lane.b32.xlu0 %v1343, 112
    %v1352 = vpop.permute.xlu0 %1351
    %v1353 = vsel %vm241, %v1348, %v1350
    %v1354 = vsel %vm241, %v1350, %v1352
    %v1357 = vadd.f32 %v1337, %v1353
    %v1358 = vadd.f32 %v1338, %v1354
    %s1359 = sld [smem:[#allocation2 + $0x3f]]
    %v1360 = vstv %s1359
    %v1361 = vmul.f32 %v1360, %v138
    %v1362 = vmul.f32 %v1360, %v134
    %v1363 = vmul.f32 %v1360, %v139
    %1367 = vrot.lane.b32.xlu0 %v1361, 96
    %v1368 = vpop.permute.xlu0 %1367
    %1369 = vrot.lane.b32.xlu0 %v1362, 96
    %v1370 = vpop.permute.xlu0 %1369
    %1371 = vrot.lane.b32.xlu0 %v1363, 96
    %v1372 = vpop.permute.xlu0 %1371
    %v1373 = vsel %vm262, %v1368, %v1370
    %v1374 = vsel %vm262, %v1370, %v1372
    %v1377 = vadd.f32 %v1357, %v1373
    %v1378 = vadd.f32 %v1358, %v1374
    %s1379 = sld [smem:[#allocation2 + $0x46]]
    %v1380 = vstv %s1379
    %v1381 = vmul.f32 %v1380, %v138
    %v1382 = vmul.f32 %v1380, %v134
    %v1383 = vmul.f32 %v1380, %v139
    %1387 = vrot.lane.b32.xlu0 %v1381, 80
    %v1388 = vpop.permute.xlu0 %1387
    %1389 = vrot.lane.b32.xlu0 %v1382, 80
    %v1390 = vpop.permute.xlu0 %1389
    %1391 = vrot.lane.b32.xlu0 %v1383, 80
    %v1392 = vpop.permute.xlu0 %1391
    %v1393 = vsel %vm283, %v1388, %v1390
    %v1394 = vsel %vm283, %v1390, %v1392
    %v1397 = vadd.f32 %v1377, %v1393
    %v1398 = vadd.f32 %v1378, %v1394
    %s1399 = sld [smem:[#allocation2 + $0x4d]]
    %v1400 = vstv %s1399
    %v1401 = vmul.f32 %v1400, %v138
    %v1402 = vmul.f32 %v1400, %v134
    %v1403 = vmul.f32 %v1400, %v139
    %1407 = vrot.lane.b32.xlu0 %v1401, 64
    %v1408 = vpop.permute.xlu0 %1407
    %1409 = vrot.lane.b32.xlu0 %v1402, 64
    %v1410 = vpop.permute.xlu0 %1409
    %1411 = vrot.lane.b32.xlu0 %v1403, 64
    %v1412 = vpop.permute.xlu0 %1411
    %v1413 = vsel %vm304, %v1408, %v1410
    %v1414 = vsel %vm304, %v1410, %v1412
    %v1417 = vadd.f32 %v1397, %v1413
    %v1418 = vadd.f32 %v1398, %v1414
    %s1419 = sld [smem:[#allocation2 + $0x54]]
    %v1420 = vstv %s1419
    %v1421 = vmul.f32 %v1420, %v138
    %v1422 = vmul.f32 %v1420, %v134
    %v1423 = vmul.f32 %v1420, %v139
    %1427 = vrot.lane.b32.xlu0 %v1421, 48
    %v1428 = vpop.permute.xlu0 %1427
    %1429 = vrot.lane.b32.xlu0 %v1422, 48
    %v1430 = vpop.permute.xlu0 %1429
    %1431 = vrot.lane.b32.xlu0 %v1423, 48
    %v1432 = vpop.permute.xlu0 %1431
    %v1433 = vsel %vm325, %v1428, %v1430
    %v1434 = vsel %vm325, %v1430, %v1432
    %v1437 = vadd.f32 %v1417, %v1433
    %v1438 = vadd.f32 %v1418, %v1434
    %s1439 = sld [smem:[#allocation2 + $0x5b]]
    %v1440 = vstv %s1439
    %v1441 = vmul.f32 %v1440, %v138
    %v1442 = vmul.f32 %v1440, %v134
    %v1443 = vmul.f32 %v1440, %v139
    %1447 = vrot.lane.b32.xlu0 %v1441, 32
    %v1448 = vpop.permute.xlu0 %1447
    %1449 = vrot.lane.b32.xlu0 %v1442, 32
    %v1450 = vpop.permute.xlu0 %1449
    %1451 = vrot.lane.b32.xlu0 %v1443, 32
    %v1452 = vpop.permute.xlu0 %1451
    %v1453 = vsel %vm346, %v1448, %v1450
    %v1454 = vsel %vm346, %v1450, %v1452
    %v1457 = vadd.f32 %v1437, %v1453
    %v1458 = vadd.f32 %v1438, %v1454
    %v1459 = vsel %vm355, %v1457, 0.0
    %v1460 = vsel %vm356, %v1458, 0.0
    %v1461 = vadd.f32 %v1331, %v1459
    %v1462 = vadd.f32 %v1332, %v1460
    %s1463 = sld [smem:[#allocation2 + $0x32]]
    %v1464 = vstv %s1463
    %v1465 = vmul.f32 %v1464, %v138
    %v1466 = vmul.f32 %v1464, %v134
    %v1467 = vmul.f32 %v1464, %v139
    %v1468 = vadd.f32 %v1465, 0.0
    %v1469 = vadd.f32 %v1466, 0.0
    %v1470 = vadd.f32 %v1467, 0.0
    %s1471 = sld [smem:[#allocation2 + $0x39]]
    %v1472 = vstv %s1471
    %v1473 = vmul.f32 %v1472, %v138
    %v1474 = vmul.f32 %v1472, %v134
    %v1475 = vmul.f32 %v1472, %v139
    %1479 = vrot.lane.b32.xlu0 %v1473, 112
    %v1480 = vpop.permute.xlu0 %1479
    %1481 = vrot.lane.b32.xlu0 %v1474, 112
    %v1482 = vpop.permute.xlu0 %1481
    %1483 = vrot.lane.b32.xlu0 %v1475, 112
    %v1484 = vpop.permute.xlu0 %1483
    %v1485 = vsel %vm241, %v1480, %v1482
    %v1486 = vsel %vm241, %v1482, %v1484
    %v1490 = vadd.f32 %v1468, %v1485
    %v1491 = vadd.f32 %v1469, %v1486
    %v1492 = vadd.f32 %v1470, %v1484
    %s1493 = sld [smem:[#allocation2 + $0x40]]
    %v1494 = vstv %s1493
    %v1495 = vmul.f32 %v1494, %v138
    %v1496 = vmul.f32 %v1494, %v134
    %v1497 = vmul.f32 %v1494, %v139
    %1501 = vrot.lane.b32.xlu0 %v1495, 96
    %v1502 = vpop.permute.xlu0 %1501
    %1503 = vrot.lane.b32.xlu0 %v1496, 96
    %v1504 = vpop.permute.xlu0 %1503
    %1505 = vrot.lane.b32.xlu0 %v1497, 96
    %v1506 = vpop.permute.xlu0 %1505
    %v1507 = vsel %vm262, %v1502, %v1504
    %v1508 = vsel %vm262, %v1504, %v1506
    %v1512 = vadd.f32 %v1490, %v1507
    %v1513 = vadd.f32 %v1491, %v1508
    %v1514 = vadd.f32 %v1492, %v1506
    %s1515 = sld [smem:[#allocation2 + $0x47]]
    %v1516 = vstv %s1515
    %v1517 = vmul.f32 %v1516, %v138
    %v1518 = vmul.f32 %v1516, %v134
    %v1519 = vmul.f32 %v1516, %v139
    %1523 = vrot.lane.b32.xlu0 %v1517, 80
    %v1524 = vpop.permute.xlu0 %1523
    %1525 = vrot.lane.b32.xlu0 %v1518, 80
    %v1526 = vpop.permute.xlu0 %1525
    %1527 = vrot.lane.b32.xlu0 %v1519, 80
    %v1528 = vpop.permute.xlu0 %1527
    %v1529 = vsel %vm283, %v1524, %v1526
    %v1530 = vsel %vm283, %v1526, %v1528
    %v1534 = vadd.f32 %v1512, %v1529
    %v1535 = vadd.f32 %v1513, %v1530
    %v1536 = vadd.f32 %v1514, %v1528
    %s1537 = sld [smem:[#allocation2 + $0x4e]]
    %v1538 = vstv %s1537
    %v1539 = vmul.f32 %v1538, %v138
    %v1540 = vmul.f32 %v1538, %v134
    %v1541 = vmul.f32 %v1538, %v139
    %1545 = vrot.lane.b32.xlu0 %v1539, 64
    %v1546 = vpop.permute.xlu0 %1545
    %1547 = vrot.lane.b32.xlu0 %v1540, 64
    %v1548 = vpop.permute.xlu0 %1547
    %1549 = vrot.lane.b32.xlu0 %v1541, 64
    %v1550 = vpop.permute.xlu0 %1549
    %v1551 = vsel %vm304, %v1546, %v1548
    %v1552 = vsel %vm304, %v1548, %v1550
    %v1556 = vadd.f32 %v1534, %v1551
    %v1557 = vadd.f32 %v1535, %v1552
    %v1558 = vadd.f32 %v1536, %v1550
    %s1559 = sld [smem:[#allocation2 + $0x55]]
    %v1560 = vstv %s1559
    %v1561 = vmul.f32 %v1560, %v138
    %v1562 = vmul.f32 %v1560, %v134
    %v1563 = vmul.f32 %v1560, %v139
    %1567 = vrot.lane.b32.xlu0 %v1561, 48
    %v1568 = vpop.permute.xlu0 %1567
    %1569 = vrot.lane.b32.xlu0 %v1562, 48
    %v1570 = vpop.permute.xlu0 %1569
    %1571 = vrot.lane.b32.xlu0 %v1563, 48
    %v1572 = vpop.permute.xlu0 %1571
    %v1573 = vsel %vm325, %v1568, %v1570
    %v1574 = vsel %vm325, %v1570, %v1572
    %v1578 = vadd.f32 %v1556, %v1573
    %v1579 = vadd.f32 %v1557, %v1574
    %v1580 = vadd.f32 %v1558, %v1572
    %s1581 = sld [smem:[#allocation2 + $0x5c]]
    %v1582 = vstv %s1581
    %v1583 = vmul.f32 %v1582, %v138
    %v1584 = vmul.f32 %v1582, %v134
    %v1585 = vmul.f32 %v1582, %v139
    %1589 = vrot.lane.b32.xlu0 %v1583, 32
    %v1590 = vpop.permute.xlu0 %1589
    %1591 = vrot.lane.b32.xlu0 %v1584, 32
    %v1592 = vpop.permute.xlu0 %1591
    %1593 = vrot.lane.b32.xlu0 %v1585, 32
    %v1594 = vpop.permute.xlu0 %1593
    %v1595 = vsel %vm346, %v1590, %v1592
    %v1596 = vsel %vm346, %v1592, %v1594
    %v1600 = vadd.f32 %v1578, %v1595
    %v1601 = vadd.f32 %v1579, %v1596
    %v1602 = vadd.f32 %v1580, %v1594
    %1606 = vrot.lane.b32.xlu0 %v1600, 127
    %v1607 = vpop.permute.xlu0 %1606
    %1608 = vrot.lane.b32.xlu0 %v1601, 127
    %v1609 = vpop.permute.xlu0 %1608
    %1610 = vrot.lane.b32.xlu0 %v1602, 127
    %v1611 = vpop.permute.xlu0 %1610
    %v1612 = vsel %vm514, %v1607, %v1609
    %v1613 = vsel %vm514, %v1609, %v1611
    %v1616 = vsel %vm503, %v1612, 0.0
    %v1617 = vsel %vm504, %v1613, 0.0
    %v1618 = vadd.f32 %v1461, %v1616
    %v1619 = vadd.f32 %v1462, %v1617
    %s1620 = sld [smem:[#allocation2 + $0x33]]
    %v1621 = vstv %s1620
    %v1622 = vmul.f32 %v1621, %v138
    %v1623 = vmul.f32 %v1621, %v134
    %v1624 = vmul.f32 %v1621, %v139
    %v1625 = vadd.f32 %v1622, 0.0
    %v1626 = vadd.f32 %v1623, 0.0
    %v1627 = vadd.f32 %v1624, 0.0
    %s1628 = sld [smem:[#allocation2 + $0x3a]]
    %v1629 = vstv %s1628
    %v1630 = vmul.f32 %v1629, %v138
    %v1631 = vmul.f32 %v1629, %v134
    %v1632 = vmul.f32 %v1629, %v139
    %1636 = vrot.lane.b32.xlu0 %v1630, 112
    %v1637 = vpop.permute.xlu0 %1636
    %1638 = vrot.lane.b32.xlu0 %v1631, 112
    %v1639 = vpop.permute.xlu0 %1638
    %1640 = vrot.lane.b32.xlu0 %v1632, 112
    %v1641 = vpop.permute.xlu0 %1640
    %v1642 = vsel %vm241, %v1637, %v1639
    %v1643 = vsel %vm241, %v1639, %v1641
    %v1647 = vadd.f32 %v1625, %v1642
    %v1648 = vadd.f32 %v1626, %v1643
    %v1649 = vadd.f32 %v1627, %v1641
    %s1650 = sld [smem:[#allocation2 + $0x41]]
    %v1651 = vstv %s1650
    %v1652 = vmul.f32 %v1651, %v138
    %v1653 = vmul.f32 %v1651, %v134
    %v1654 = vmul.f32 %v1651, %v139
    %1658 = vrot.lane.b32.xlu0 %v1652, 96
    %v1659 = vpop.permute.xlu0 %1658
    %1660 = vrot.lane.b32.xlu0 %v1653, 96
    %v1661 = vpop.permute.xlu0 %1660
    %1662 = vrot.lane.b32.xlu0 %v1654, 96
    %v1663 = vpop.permute.xlu0 %1662
    %v1664 = vsel %vm262, %v1659, %v1661
    %v1665 = vsel %vm262, %v1661, %v1663
    %v1669 = vadd.f32 %v1647, %v1664
    %v1670 = vadd.f32 %v1648, %v1665
    %v1671 = vadd.f32 %v1649, %v1663
    %s1672 = sld [smem:[#allocation2 + $0x48]]
    %v1673 = vstv %s1672
    %v1674 = vmul.f32 %v1673, %v138
    %v1675 = vmul.f32 %v1673, %v134
    %v1676 = vmul.f32 %v1673, %v139
    %1680 = vrot.lane.b32.xlu0 %v1674, 80
    %v1681 = vpop.permute.xlu0 %1680
    %1682 = vrot.lane.b32.xlu0 %v1675, 80
    %v1683 = vpop.permute.xlu0 %1682
    %1684 = vrot.lane.b32.xlu0 %v1676, 80
    %v1685 = vpop.permute.xlu0 %1684
    %v1686 = vsel %vm283, %v1681, %v1683
    %v1687 = vsel %vm283, %v1683, %v1685
    %v1691 = vadd.f32 %v1669, %v1686
    %v1692 = vadd.f32 %v1670, %v1687
    %v1693 = vadd.f32 %v1671, %v1685
    %s1694 = sld [smem:[#allocation2 + $0x4f]]
    %v1695 = vstv %s1694
    %v1696 = vmul.f32 %v1695, %v138
    %v1697 = vmul.f32 %v1695, %v134
    %v1698 = vmul.f32 %v1695, %v139
    %1702 = vrot.lane.b32.xlu0 %v1696, 64
    %v1703 = vpop.permute.xlu0 %1702
    %1704 = vrot.lane.b32.xlu0 %v1697, 64
    %v1705 = vpop.permute.xlu0 %1704
    %1706 = vrot.lane.b32.xlu0 %v1698, 64
    %v1707 = vpop.permute.xlu0 %1706
    %v1708 = vsel %vm304, %v1703, %v1705
    %v1709 = vsel %vm304, %v1705, %v1707
    %v1713 = vadd.f32 %v1691, %v1708
    %v1714 = vadd.f32 %v1692, %v1709
    %v1715 = vadd.f32 %v1693, %v1707
    %s1716 = sld [smem:[#allocation2 + $0x56]]
    %v1717 = vstv %s1716
    %v1718 = vmul.f32 %v1717, %v138
    %v1719 = vmul.f32 %v1717, %v134
    %v1720 = vmul.f32 %v1717, %v139
    %1724 = vrot.lane.b32.xlu0 %v1718, 48
    %v1725 = vpop.permute.xlu0 %1724
    %1726 = vrot.lane.b32.xlu0 %v1719, 48
    %v1727 = vpop.permute.xlu0 %1726
    %1728 = vrot.lane.b32.xlu0 %v1720, 48
    %v1729 = vpop.permute.xlu0 %1728
    %v1730 = vsel %vm325, %v1725, %v1727
    %v1731 = vsel %vm325, %v1727, %v1729
    %v1735 = vadd.f32 %v1713, %v1730
    %v1736 = vadd.f32 %v1714, %v1731
    %v1737 = vadd.f32 %v1715, %v1729
    %s1738 = sld [smem:[#allocation2 + $0x5d]]
    %v1739 = vstv %s1738
    %v1740 = vmul.f32 %v1739, %v138
    %v1741 = vmul.f32 %v1739, %v134
    %v1742 = vmul.f32 %v1739, %v139
    %1746 = vrot.lane.b32.xlu0 %v1740, 32
    %v1747 = vpop.permute.xlu0 %1746
    %1748 = vrot.lane.b32.xlu0 %v1741, 32
    %v1749 = vpop.permute.xlu0 %1748
    %1750 = vrot.lane.b32.xlu0 %v1742, 32
    %v1751 = vpop.permute.xlu0 %1750
    %v1752 = vsel %vm346, %v1747, %v1749
    %v1753 = vsel %vm346, %v1749, %v1751
    %v1757 = vadd.f32 %v1735, %v1752
    %v1758 = vadd.f32 %v1736, %v1753
    %v1759 = vadd.f32 %v1737, %v1751
    %1763 = vrot.lane.b32.xlu0 %v1757, 126
    %v1764 = vpop.permute.xlu0 %1763
    %1765 = vrot.lane.b32.xlu0 %v1758, 126
    %v1766 = vpop.permute.xlu0 %1765
    %1767 = vrot.lane.b32.xlu0 %v1759, 126
    %v1768 = vpop.permute.xlu0 %1767
    %v1769 = vsel %vm676, %v1764, %v1766
    %v1770 = vsel %vm676, %v1766, %v1768
    %v1773 = vsel %vm665, %v1769, 0.0
    %v1774 = vsel %vm666, %v1770, 0.0
    %v1775 = vadd.f32 %v1618, %v1773
    %v1776 = vadd.f32 %v1619, %v1774
    %s1777 = sld [smem:[#allocation2 + $0x34]]
    %v1778 = vstv %s1777
    %v1779 = vmul.f32 %v1778, %v138
    %v1780 = vmul.f32 %v1778, %v134
    %v1781 = vmul.f32 %v1778, %v139
    %v1782 = vadd.f32 %v1779, 0.0
    %v1783 = vadd.f32 %v1780, 0.0
    %v1784 = vadd.f32 %v1781, 0.0
    %s1785 = sld [smem:[#allocation2 + $0x3b]]
    %v1786 = vstv %s1785
    %v1787 = vmul.f32 %v1786, %v138
    %v1788 = vmul.f32 %v1786, %v134
    %v1789 = vmul.f32 %v1786, %v139
    %1793 = vrot.lane.b32.xlu0 %v1787, 112
    %v1794 = vpop.permute.xlu0 %1793
    %1795 = vrot.lane.b32.xlu0 %v1788, 112
    %v1796 = vpop.permute.xlu0 %1795
    %1797 = vrot.lane.b32.xlu0 %v1789, 112
    %v1798 = vpop.permute.xlu0 %1797
    %v1799 = vsel %vm241, %v1794, %v1796
    %v1800 = vsel %vm241, %v1796, %v1798
    %v1804 = vadd.f32 %v1782, %v1799
    %v1805 = vadd.f32 %v1783, %v1800
    %v1806 = vadd.f32 %v1784, %v1798
    %s1807 = sld [smem:[#allocation2 + $0x42]]
    %v1808 = vstv %s1807
    %v1809 = vmul.f32 %v1808, %v138
    %v1810 = vmul.f32 %v1808, %v134
    %v1811 = vmul.f32 %v1808, %v139
    %1815 = vrot.lane.b32.xlu0 %v1809, 96
    %v1816 = vpop.permute.xlu0 %1815
    %1817 = vrot.lane.b32.xlu0 %v1810, 96
    %v1818 = vpop.permute.xlu0 %1817
    %1819 = vrot.lane.b32.xlu0 %v1811, 96
    %v1820 = vpop.permute.xlu0 %1819
    %v1821 = vsel %vm262, %v1816, %v1818
    %v1822 = vsel %vm262, %v1818, %v1820
    %v1826 = vadd.f32 %v1804, %v1821
    %v1827 = vadd.f32 %v1805, %v1822
    %v1828 = vadd.f32 %v1806, %v1820
    %s1829 = sld [smem:[#allocation2 + $0x49]]
    %v1830 = vstv %s1829
    %v1831 = vmul.f32 %v1830, %v138
    %v1832 = vmul.f32 %v1830, %v134
    %v1833 = vmul.f32 %v1830, %v139
    %1837 = vrot.lane.b32.xlu0 %v1831, 80
    %v1838 = vpop.permute.xlu0 %1837
    %1839 = vrot.lane.b32.xlu0 %v1832, 80
    %v1840 = vpop.permute.xlu0 %1839
    %1841 = vrot.lane.b32.xlu0 %v1833, 80
    %v1842 = vpop.permute.xlu0 %1841
    %v1843 = vsel %vm283, %v1838, %v1840
    %v1844 = vsel %vm283, %v1840, %v1842
    %v1848 = vadd.f32 %v1826, %v1843
    %v1849 = vadd.f32 %v1827, %v1844
    %v1850 = vadd.f32 %v1828, %v1842
    %s1851 = sld [smem:[#allocation2 + $0x50]]
    %v1852 = vstv %s1851
    %v1853 = vmul.f32 %v1852, %v138
    %v1854 = vmul.f32 %v1852, %v134
    %v1855 = vmul.f32 %v1852, %v139
    %1859 = vrot.lane.b32.xlu0 %v1853, 64
    %v1860 = vpop.permute.xlu0 %1859
    %1861 = vrot.lane.b32.xlu0 %v1854, 64
    %v1862 = vpop.permute.xlu0 %1861
    %1863 = vrot.lane.b32.xlu0 %v1855, 64
    %v1864 = vpop.permute.xlu0 %1863
    %v1865 = vsel %vm304, %v1860, %v1862
    %v1866 = vsel %vm304, %v1862, %v1864
    %v1870 = vadd.f32 %v1848, %v1865
    %v1871 = vadd.f32 %v1849, %v1866
    %v1872 = vadd.f32 %v1850, %v1864
    %s1873 = sld [smem:[#allocation2 + $0x57]]
    %v1874 = vstv %s1873
    %v1875 = vmul.f32 %v1874, %v138
    %v1876 = vmul.f32 %v1874, %v134
    %v1877 = vmul.f32 %v1874, %v139
    %1881 = vrot.lane.b32.xlu0 %v1875, 48
    %v1882 = vpop.permute.xlu0 %1881
    %1883 = vrot.lane.b32.xlu0 %v1876, 48
    %v1884 = vpop.permute.xlu0 %1883
    %1885 = vrot.lane.b32.xlu0 %v1877, 48
    %v1886 = vpop.permute.xlu0 %1885
    %v1887 = vsel %vm325, %v1882, %v1884
    %v1888 = vsel %vm325, %v1884, %v1886
    %v1892 = vadd.f32 %v1870, %v1887
    %v1893 = vadd.f32 %v1871, %v1888
    %v1894 = vadd.f32 %v1872, %v1886
    %s1895 = sld [smem:[#allocation2 + $0x5e]]
    %v1896 = vstv %s1895
    %v1897 = vmul.f32 %v1896, %v138
    %v1898 = vmul.f32 %v1896, %v134
    %v1899 = vmul.f32 %v1896, %v139
    %1903 = vrot.lane.b32.xlu0 %v1897, 32
    %v1904 = vpop.permute.xlu0 %1903
    %1905 = vrot.lane.b32.xlu0 %v1898, 32
    %v1906 = vpop.permute.xlu0 %1905
    %1907 = vrot.lane.b32.xlu0 %v1899, 32
    %v1908 = vpop.permute.xlu0 %1907
    %v1909 = vsel %vm346, %v1904, %v1906
    %v1910 = vsel %vm346, %v1906, %v1908
    %v1914 = vadd.f32 %v1892, %v1909
    %v1915 = vadd.f32 %v1893, %v1910
    %v1916 = vadd.f32 %v1894, %v1908
    %1920 = vrot.lane.b32.xlu0 %v1914, 125
    %v1921 = vpop.permute.xlu0 %1920
    %1922 = vrot.lane.b32.xlu0 %v1915, 125
    %v1923 = vpop.permute.xlu0 %1922
    %1924 = vrot.lane.b32.xlu0 %v1916, 125
    %v1925 = vpop.permute.xlu0 %1924
    %v1926 = vsel %vm838, %v1921, %v1923
    %v1927 = vsel %vm838, %v1923, %v1925
    %v1930 = vsel %vm827, %v1926, 0.0
    %v1931 = vsel %vm828, %v1927, 0.0
    %v1932 = vadd.f32 %v1775, %v1930
    %v1933 = vadd.f32 %v1776, %v1931
    %s1934 = sld [smem:[#allocation2 + $0x35]]
    %v1935 = vstv %s1934
    %v1936 = vmul.f32 %v1935, %v138
    %v1937 = vmul.f32 %v1935, %v134
    %v1938 = vmul.f32 %v1935, %v139
    %v1939 = vadd.f32 %v1936, 0.0
    %v1940 = vadd.f32 %v1937, 0.0
    %v1941 = vadd.f32 %v1938, 0.0
    %s1942 = sld [smem:[#allocation2 + $0x3c]]
    %v1943 = vstv %s1942
    %v1944 = vmul.f32 %v1943, %v138
    %v1945 = vmul.f32 %v1943, %v134
    %v1946 = vmul.f32 %v1943, %v139
    %1950 = vrot.lane.b32.xlu0 %v1944, 112
    %v1951 = vpop.permute.xlu0 %1950
    %1952 = vrot.lane.b32.xlu0 %v1945, 112
    %v1953 = vpop.permute.xlu0 %1952
    %1954 = vrot.lane.b32.xlu0 %v1946, 112
    %v1955 = vpop.permute.xlu0 %1954
    %v1956 = vsel %vm241, %v1951, %v1953
    %v1957 = vsel %vm241, %v1953, %v1955
    %v1961 = vadd.f32 %v1939, %v1956
    %v1962 = vadd.f32 %v1940, %v1957
    %v1963 = vadd.f32 %v1941, %v1955
    %s1964 = sld [smem:[#allocation2 + $0x43]]
    %v1965 = vstv %s1964
    %v1966 = vmul.f32 %v1965, %v138
    %v1967 = vmul.f32 %v1965, %v134
    %v1968 = vmul.f32 %v1965, %v139
    %1972 = vrot.lane.b32.xlu0 %v1966, 96
    %v1973 = vpop.permute.xlu0 %1972
    %1974 = vrot.lane.b32.xlu0 %v1967, 96
    %v1975 = vpop.permute.xlu0 %1974
    %1976 = vrot.lane.b32.xlu0 %v1968, 96
    %v1977 = vpop.permute.xlu0 %1976
    %v1978 = vsel %vm262, %v1973, %v1975
    %v1979 = vsel %vm262, %v1975, %v1977
    %v1983 = vadd.f32 %v1961, %v1978
    %v1984 = vadd.f32 %v1962, %v1979
    %v1985 = vadd.f32 %v1963, %v1977
    %s1986 = sld [smem:[#allocation2 + $0x4a]]
    %v1987 = vstv %s1986
    %v1988 = vmul.f32 %v1987, %v138
    %v1989 = vmul.f32 %v1987, %v134
    %v1990 = vmul.f32 %v1987, %v139
    %1994 = vrot.lane.b32.xlu0 %v1988, 80
    %v1995 = vpop.permute.xlu0 %1994
    %1996 = vrot.lane.b32.xlu0 %v1989, 80
    %v1997 = vpop.permute.xlu0 %1996
    %1998 = vrot.lane.b32.xlu0 %v1990, 80
    %v1999 = vpop.permute.xlu0 %1998
    %v2000 = vsel %vm283, %v1995, %v1997
    %v2001 = vsel %vm283, %v1997, %v1999
    %v2005 = vadd.f32 %v1983, %v2000
    %v2006 = vadd.f32 %v1984, %v2001
    %v2007 = vadd.f32 %v1985, %v1999
    %s2008 = sld [smem:[#allocation2 + $0x51]]
    %v2009 = vstv %s2008
    %v2010 = vmul.f32 %v2009, %v138
    %v2011 = vmul.f32 %v2009, %v134
    %v2012 = vmul.f32 %v2009, %v139
    %2016 = vrot.lane.b32.xlu0 %v2010, 64
    %v2017 = vpop.permute.xlu0 %2016
    %2018 = vrot.lane.b32.xlu0 %v2011, 64
    %v2019 = vpop.permute.xlu0 %2018
    %2020 = vrot.lane.b32.xlu0 %v2012, 64
    %v2021 = vpop.permute.xlu0 %2020
    %v2022 = vsel %vm304, %v2017, %v2019
    %v2023 = vsel %vm304, %v2019, %v2021
    %v2027 = vadd.f32 %v2005, %v2022
    %v2028 = vadd.f32 %v2006, %v2023
    %v2029 = vadd.f32 %v2007, %v2021
    %s2030 = sld [smem:[#allocation2 + $0x58]]
    %v2031 = vstv %s2030
    %v2032 = vmul.f32 %v2031, %v138
    %v2033 = vmul.f32 %v2031, %v134
    %v2034 = vmul.f32 %v2031, %v139
    %2038 = vrot.lane.b32.xlu0 %v2032, 48
    %v2039 = vpop.permute.xlu0 %2038
    %2040 = vrot.lane.b32.xlu0 %v2033, 48
    %v2041 = vpop.permute.xlu0 %2040
    %2042 = vrot.lane.b32.xlu0 %v2034, 48
    %v2043 = vpop.permute.xlu0 %2042
    %v2044 = vsel %vm325, %v2039, %v2041
    %v2045 = vsel %vm325, %v2041, %v2043
    %v2049 = vadd.f32 %v2027, %v2044
    %v2050 = vadd.f32 %v2028, %v2045
    %v2051 = vadd.f32 %v2029, %v2043
    %s2052 = sld [smem:[#allocation2 + $0x5f]]
    %v2053 = vstv %s2052
    %v2054 = vmul.f32 %v2053, %v138
    %v2055 = vmul.f32 %v2053, %v134
    %v2056 = vmul.f32 %v2053, %v139
    %2060 = vrot.lane.b32.xlu0 %v2054, 32
    %v2061 = vpop.permute.xlu0 %2060
    %2062 = vrot.lane.b32.xlu0 %v2055, 32
    %v2063 = vpop.permute.xlu0 %2062
    %2064 = vrot.lane.b32.xlu0 %v2056, 32
    %v2065 = vpop.permute.xlu0 %2064
    %v2066 = vsel %vm346, %v2061, %v2063
    %v2067 = vsel %vm346, %v2063, %v2065
    %v2071 = vadd.f32 %v2049, %v2066
    %v2072 = vadd.f32 %v2050, %v2067
    %v2073 = vadd.f32 %v2051, %v2065
    %2077 = vrot.lane.b32.xlu0 %v2071, 124
    %v2078 = vpop.permute.xlu0 %2077
    %2079 = vrot.lane.b32.xlu0 %v2072, 124
    %v2080 = vpop.permute.xlu0 %2079
    %2081 = vrot.lane.b32.xlu0 %v2073, 124
    %v2082 = vpop.permute.xlu0 %2081
    %v2083 = vsel %vm1000, %v2078, %v2080
    %v2084 = vsel %vm1000, %v2080, %v2082
    %v2087 = vsel %vm989, %v2083, 0.0
    %v2088 = vsel %vm990, %v2084, 0.0
    %v2089 = vadd.f32 %v1932, %v2087
    %v2090 = vadd.f32 %v1933, %v2088
    %s2091 = sld [smem:[#allocation2 + $0x36]]
    %v2092 = vstv %s2091
    %v2093 = vmul.f32 %v2092, %v138
    %v2094 = vmul.f32 %v2092, %v134
    %v2095 = vmul.f32 %v2092, %v139
    %v2096 = vadd.f32 %v2093, 0.0
    %v2097 = vadd.f32 %v2094, 0.0
    %v2098 = vadd.f32 %v2095, 0.0
    %s2099 = sld [smem:[#allocation2 + $0x3d]]
    %v2100 = vstv %s2099
    %v2101 = vmul.f32 %v2100, %v138
    %v2102 = vmul.f32 %v2100, %v134
    %v2103 = vmul.f32 %v2100, %v139
    %2107 = vrot.lane.b32.xlu0 %v2101, 112
    %v2108 = vpop.permute.xlu0 %2107
    %2109 = vrot.lane.b32.xlu0 %v2102, 112
    %v2110 = vpop.permute.xlu0 %2109
    %2111 = vrot.lane.b32.xlu0 %v2103, 112
    %v2112 = vpop.permute.xlu0 %2111
    %v2113 = vsel %vm241, %v2108, %v2110
    %v2114 = vsel %vm241, %v2110, %v2112
    %v2118 = vadd.f32 %v2096, %v2113
    %v2119 = vadd.f32 %v2097, %v2114
    %v2120 = vadd.f32 %v2098, %v2112
    %s2121 = sld [smem:[#allocation2 + $0x44]]
    %v2122 = vstv %s2121
    %v2123 = vmul.f32 %v2122, %v138
    %v2124 = vmul.f32 %v2122, %v134
    %v2125 = vmul.f32 %v2122, %v139
    %2129 = vrot.lane.b32.xlu0 %v2123, 96
    %v2130 = vpop.permute.xlu0 %2129
    %2131 = vrot.lane.b32.xlu0 %v2124, 96
    %v2132 = vpop.permute.xlu0 %2131
    %2133 = vrot.lane.b32.xlu0 %v2125, 96
    %v2134 = vpop.permute.xlu0 %2133
    %v2135 = vsel %vm262, %v2130, %v2132
    %v2136 = vsel %vm262, %v2132, %v2134
    %v2140 = vadd.f32 %v2118, %v2135
    %v2141 = vadd.f32 %v2119, %v2136
    %v2142 = vadd.f32 %v2120, %v2134
    %s2143 = sld [smem:[#allocation2 + $0x4b]]
    %v2144 = vstv %s2143
    %v2145 = vmul.f32 %v2144, %v138
    %v2146 = vmul.f32 %v2144, %v134
    %v2147 = vmul.f32 %v2144, %v139
    %2151 = vrot.lane.b32.xlu0 %v2145, 80
    %v2152 = vpop.permute.xlu0 %2151
    %2153 = vrot.lane.b32.xlu0 %v2146, 80
    %v2154 = vpop.permute.xlu0 %2153
    %2155 = vrot.lane.b32.xlu0 %v2147, 80
    %v2156 = vpop.permute.xlu0 %2155
    %v2157 = vsel %vm283, %v2152, %v2154
    %v2158 = vsel %vm283, %v2154, %v2156
    %v2162 = vadd.f32 %v2140, %v2157
    %v2163 = vadd.f32 %v2141, %v2158
    %v2164 = vadd.f32 %v2142, %v2156
    %s2165 = sld [smem:[#allocation2 + $0x52]]
    %v2166 = vstv %s2165
    %v2167 = vmul.f32 %v2166, %v138
    %v2168 = vmul.f32 %v2166, %v134
    %v2169 = vmul.f32 %v2166, %v139
    %2173 = vrot.lane.b32.xlu0 %v2167, 64
    %v2174 = vpop.permute.xlu0 %2173
    %2175 = vrot.lane.b32.xlu0 %v2168, 64
    %v2176 = vpop.permute.xlu0 %2175
    %2177 = vrot.lane.b32.xlu0 %v2169, 64
    %v2178 = vpop.permute.xlu0 %2177
    %v2179 = vsel %vm304, %v2174, %v2176
    %v2180 = vsel %vm304, %v2176, %v2178
    %v2184 = vadd.f32 %v2162, %v2179
    %v2185 = vadd.f32 %v2163, %v2180
    %v2186 = vadd.f32 %v2164, %v2178
    %s2187 = sld [smem:[#allocation2 + $0x59]]
    %v2188 = vstv %s2187
    %v2189 = vmul.f32 %v2188, %v138
    %v2190 = vmul.f32 %v2188, %v134
    %v2191 = vmul.f32 %v2188, %v139
    %2195 = vrot.lane.b32.xlu0 %v2189, 48
    %v2196 = vpop.permute.xlu0 %2195
    %2197 = vrot.lane.b32.xlu0 %v2190, 48
    %v2198 = vpop.permute.xlu0 %2197
    %2199 = vrot.lane.b32.xlu0 %v2191, 48
    %v2200 = vpop.permute.xlu0 %2199
    %v2201 = vsel %vm325, %v2196, %v2198
    %v2202 = vsel %vm325, %v2198, %v2200
    %v2206 = vadd.f32 %v2184, %v2201
    %v2207 = vadd.f32 %v2185, %v2202
    %v2208 = vadd.f32 %v2186, %v2200
    %s2209 = sld [smem:[#allocation2 + $0x60]]
    %v2210 = vstv %s2209
    %v2211 = vmul.f32 %v2210, %v138
    %v2212 = vmul.f32 %v2210, %v134
    %v2213 = vmul.f32 %v2210, %v139
    %2217 = vrot.lane.b32.xlu0 %v2211, 32
    %v2218 = vpop.permute.xlu0 %2217
    %2219 = vrot.lane.b32.xlu0 %v2212, 32
    %v2220 = vpop.permute.xlu0 %2219
    %2221 = vrot.lane.b32.xlu0 %v2213, 32
    %v2222 = vpop.permute.xlu0 %2221
    %v2223 = vsel %vm346, %v2218, %v2220
    %v2224 = vsel %vm346, %v2220, %v2222
    %v2228 = vadd.f32 %v2206, %v2223
    %v2229 = vadd.f32 %v2207, %v2224
    %v2230 = vadd.f32 %v2208, %v2222
    %2234 = vrot.lane.b32.xlu0 %v2228, 123
    %v2235 = vpop.permute.xlu0 %2234
    %2236 = vrot.lane.b32.xlu0 %v2229, 123
    %v2237 = vpop.permute.xlu0 %2236
    %2238 = vrot.lane.b32.xlu0 %v2230, 123
    %v2239 = vpop.permute.xlu0 %2238
    %v2240 = vsel %vm1162, %v2235, %v2237
    %v2241 = vsel %vm1162, %v2237, %v2239
    %v2244 = vsel %vm1151, %v2240, 0.0
    %v2245 = vsel %vm1152, %v2241, 0.0
    %v2246 = vadd.f32 %v2089, %v2244
    %v2247 = vadd.f32 %v2090, %v2245
    %s2248 = sld [smem:[#allocation2 + $0x37]]
    %v2249 = vstv %s2248
    %v2250 = vmul.f32 %v2249, %v138
    %v2251 = vmul.f32 %v2249, %v134
    %v2252 = vmul.f32 %v2249, %v139
    %v2253 = vadd.f32 %v2250, 0.0
    %v2254 = vadd.f32 %v2251, 0.0
    %v2255 = vadd.f32 %v2252, 0.0
    %s2256 = sld [smem:[#allocation2 + $0x3e]]
    %v2257 = vstv %s2256
    %v2258 = vmul.f32 %v2257, %v138
    %v2259 = vmul.f32 %v2257, %v134
    %v2260 = vmul.f32 %v2257, %v139
    %2264 = vrot.lane.b32.xlu0 %v2258, 112
    %v2265 = vpop.permute.xlu0 %2264
    %2266 = vrot.lane.b32.xlu0 %v2259, 112
    %v2267 = vpop.permute.xlu0 %2266
    %2268 = vrot.lane.b32.xlu0 %v2260, 112
    %v2269 = vpop.permute.xlu0 %2268
    %v2270 = vsel %vm241, %v2265, %v2267
    %v2271 = vsel %vm241, %v2267, %v2269
    %v2275 = vadd.f32 %v2253, %v2270
    %v2276 = vadd.f32 %v2254, %v2271
    %v2277 = vadd.f32 %v2255, %v2269
    %s2278 = sld [smem:[#allocation2 + $0x45]]
    %v2279 = vstv %s2278
    %v2280 = vmul.f32 %v2279, %v138
    %v2281 = vmul.f32 %v2279, %v134
    %v2282 = vmul.f32 %v2279, %v139
    %2286 = vrot.lane.b32.xlu0 %v2280, 96
    %v2287 = vpop.permute.xlu0 %2286
    %2288 = vrot.lane.b32.xlu0 %v2281, 96
    %v2289 = vpop.permute.xlu0 %2288
    %2290 = vrot.lane.b32.xlu0 %v2282, 96
    %v2291 = vpop.permute.xlu0 %2290
    %v2292 = vsel %vm262, %v2287, %v2289
    %v2293 = vsel %vm262, %v2289, %v2291
    %v2297 = vadd.f32 %v2275, %v2292
    %v2298 = vadd.f32 %v2276, %v2293
    %v2299 = vadd.f32 %v2277, %v2291
    %s2300 = sld [smem:[#allocation2 + $0x4c]]
    %v2301 = vstv %s2300
    %v2302 = vmul.f32 %v2301, %v138
    %v2303 = vmul.f32 %v2301, %v134
    %v2304 = vmul.f32 %v2301, %v139
    %2308 = vrot.lane.b32.xlu0 %v2302, 80
    %v2309 = vpop.permute.xlu0 %2308
    %2310 = vrot.lane.b32.xlu0 %v2303, 80
    %v2311 = vpop.permute.xlu0 %2310
    %2312 = vrot.lane.b32.xlu0 %v2304, 80
    %v2313 = vpop.permute.xlu0 %2312
    %v2314 = vsel %vm283, %v2309, %v2311
    %v2315 = vsel %vm283, %v2311, %v2313
    %v2319 = vadd.f32 %v2297, %v2314
    %v2320 = vadd.f32 %v2298, %v2315
    %v2321 = vadd.f32 %v2299, %v2313
    %s2322 = sld [smem:[#allocation2 + $0x53]]
    %v2323 = vstv %s2322
    %v2324 = vmul.f32 %v2323, %v138
    %v2325 = vmul.f32 %v2323, %v134
    %v2326 = vmul.f32 %v2323, %v139
    %2330 = vrot.lane.b32.xlu0 %v2324, 64
    %v2331 = vpop.permute.xlu0 %2330
    %2332 = vrot.lane.b32.xlu0 %v2325, 64
    %v2333 = vpop.permute.xlu0 %2332
    %2334 = vrot.lane.b32.xlu0 %v2326, 64
    %v2335 = vpop.permute.xlu0 %2334
    %v2336 = vsel %vm304, %v2331, %v2333
    %v2337 = vsel %vm304, %v2333, %v2335
    %v2341 = vadd.f32 %v2319, %v2336
    %v2342 = vadd.f32 %v2320, %v2337
    %v2343 = vadd.f32 %v2321, %v2335
    %s2344 = sld [smem:[#allocation2 + $0x5a]]
    %v2345 = vstv %s2344
    %v2346 = vmul.f32 %v2345, %v138
    %v2347 = vmul.f32 %v2345, %v134
    %v2348 = vmul.f32 %v2345, %v139
    %2352 = vrot.lane.b32.xlu0 %v2346, 48
    %v2353 = vpop.permute.xlu0 %2352
    %2354 = vrot.lane.b32.xlu0 %v2347, 48
    %v2355 = vpop.permute.xlu0 %2354
    %2356 = vrot.lane.b32.xlu0 %v2348, 48
    %v2357 = vpop.permute.xlu0 %2356
    %v2358 = vsel %vm325, %v2353, %v2355
    %v2359 = vsel %vm325, %v2355, %v2357
    %v2363 = vadd.f32 %v2341, %v2358
    %v2364 = vadd.f32 %v2342, %v2359
    %v2365 = vadd.f32 %v2343, %v2357
    %s2366 = sld [smem:[#allocation2 + $0x61]]
    %v2367 = vstv %s2366
    %v2368 = vmul.f32 %v2367, %v138
    %v2369 = vmul.f32 %v2367, %v134
    %v2370 = vmul.f32 %v2367, %v139
    %2374 = vrot.lane.b32.xlu0 %v2368, 32
    %v2375 = vpop.permute.xlu0 %2374
    %2376 = vrot.lane.b32.xlu0 %v2369, 32
    %v2377 = vpop.permute.xlu0 %2376
    %2378 = vrot.lane.b32.xlu0 %v2370, 32
    %v2379 = vpop.permute.xlu0 %2378
    %v2380 = vsel %vm346, %v2375, %v2377
    %v2381 = vsel %vm346, %v2377, %v2379
    %v2385 = vadd.f32 %v2363, %v2380
    %v2386 = vadd.f32 %v2364, %v2381
    %v2387 = vadd.f32 %v2365, %v2379
    %2391 = vrot.lane.b32.xlu0 %v2385, 122
    %v2392 = vpop.permute.xlu0 %2391
    %2393 = vrot.lane.b32.xlu0 %v2386, 122
    %v2394 = vpop.permute.xlu0 %2393
    %2395 = vrot.lane.b32.xlu0 %v2387, 122
    %v2396 = vpop.permute.xlu0 %2395
    %v2397 = vsel %vm1324, %v2392, %v2394
    %v2398 = vsel %vm1324, %v2394, %v2396
    %v2401 = vsel %vm1313, %v2397, 0.0
    %v2402 = vsel %vm1314, %v2398, 0.0
    %v2403 = vadd.f32 %v2246, %v2401
    %v2404 = vadd.f32 %v2247, %v2402
    %v2405 = vxor.u32 %v2403, 2147483648
    %v2406 = vxor.u32 %v2404, 2147483648
    %v2407 = vmul.f32 %v2405, 1.442695
    %v2408 = vpow.pop %v2407
    %v2409 = vmul.f32 %v2406, 1.442695
    %v2410 = vpow.pop %v2409
    %v2411 = vadd.f32 %v2408, 1.0
    %v2412 = vadd.f32 %v2410, 1.0
    %v2413 = vrcp.pop %v2411
    %v2414 = vmul.f32 1.0, %v2413
    %v2415 = vrcp.pop %v2412
    %v2416 = vmul.f32 1.0, %v2415
    %v2419 = vcombine.low %v2414, %v2416
    %v2421 = vunpack.c.l.s4 1983009808
    %v2422 = vunpack.c.0.s8 %v2421
    %v2423 = vlaneseq
    %v2424 = vshrl.u32 %v2423, 7
    %v2425 = vsub.s32 %v2422, %v2424
    %v2426 = vrot.slane %v2419, %v2425
    %2428 = vst [vmem:[#allocation7] sm:$0xf] %v2426
    // Predicated region
    $region18: #{tpu_custom_call.1} parent=1 // pred_check
      _
    $region19: #{tpu_custom_call.1} parent=1 // pred_check_branch
      %2430 = sbr.rel (0) target = $region21
    $region20: #{tpu_custom_call.1} parent=1 // pred_region
      %s2432 = ssub.s32 64, 64
      %2433 = vsyncadd [#allocation4], %s2432
      %s2435 = sshll.u32 [#allocation7], 4
      %s2436 = int_to_ptr.vmem [resolvable:$true] %s2435
      %2438 = dma.vmem_to_hbm [thread:$0]  %s2436, 64, %s2, [#allocation4]
    $region21: #{tpu_custom_call.1} parent=1 // pred_fallthru
      _
    // Predicated region
    $region22: #{tpu_custom_call.1} parent=1 // pred_check
      _
    $region23: #{tpu_custom_call.1} parent=1 // pred_check_branch
      %2440 = sbr.rel (0) target = $region25
    $region24: #{tpu_custom_call.1} parent=1 // pred_region
      %2441 = dma.done [#allocation4], 64
    $region25: #{tpu_custom_call.1} parent=1 // pred_fallthru
      _
    %2442 = vsyncpa [#allocation3], 1
    %2443 = vsyncpa [#allocation4], 1
    %2444 = vsyncpa [#allocation5], 1

</llo_original>
